<compile_context>
chip_gen: v6e
topology: v6e:2x2x1
jax: 0.10.0
libtpu: 0.0.40
codegen_flags: <defaults>
</compile_context>

<pallas_src>
import numpy as np
import jax
import jax.numpy as jnp
from jax import lax
from jax.experimental import pallas as pl
from jax.experimental.pallas import tpu as pltpu


def _round_up(n, m):
    return ((n + m - 1) // m) * m


def _cdiv(a, b):
    return (a + b - 1) // b


# ----------------------------- Pallas kernel ------------------------------ #
def widedeep_kernel(sp_ref, xd_ref,
                    w1s_ref, w1d_ref, b1_ref,
                    w2_ref, b2_ref,
                    head_ref, wide_ref, cst_ref,
                    out_ref):
    """Fused WideDeep forward for one batch tile (eval semantics).

    sp_ref:   [bt, n_cate] int32  sparse ids, pre-offset into combined vocab
    xd_ref:   [bt, nd]     f32    dense features (f32 so the wide head is exact)
    w1s_ref:  [TVp, h1]    cdt    embedding tables folded into layer-1 weights,
                                  BN1 scale folded
    w1d_ref:  [nd, h1]     cdt    dense slice of layer-1 weights, BN1 folded
    b1_ref:   [1, h1]      f32    b1*s1 + t1
    w2_ref:   [h1, h2]     cdt    w2*s2
    b2_ref:   [1, h2]      f32    b2*s2 + t2
    head_ref: [1, h2]      f32    0.5 * output-head weights (row)
    wide_ref: [1, nd]      f32    0.5 * wide weights (row)
    cst_ref:  [1, 1]       f32    0.5 * (bout + wide_b)
    out_ref:  [1, bt]      f32    sigmoid(logit), batch along lanes (lane-dense)
    """
    sp = sp_ref[...]                       # [bt, nc] int32
    xd = xd_ref[...]                       # [bt, nd] f32
    bt, n_cate = sp.shape
    tvp = w1s_ref.shape[0]
    cdt = w1s_ref.dtype

    # --- embedding lookup as a multi-hot matmul -----------------------------
    # mh[b, off_i + id_i(b)] = 1  (disjoint per-feature column ranges), so
    # mh @ w1s == sum_i E_i[id_i] @ W1_sparse_i  == sparse_embed @ W1_sparse.
    col = lax.broadcasted_iota(jnp.int32, (bt, tvp), 1)
    mh = jnp.zeros((bt, tvp), jnp.float32)
    for i in range(n_cate):                # static python loop, tiny
        mh = jnp.where(col == sp[:, i:i + 1], 1.0, mh)

    # --- deep layer 1: Linear (BN folded) -> ReLU (dropout = id in eval) ----
    h = jnp.dot(mh.astype(cdt), w1s_ref[...],
                preferred_element_type=jnp.float32)
    h = h + jnp.dot(xd.astype(cdt), w1d_ref[...],
                    preferred_element_type=jnp.float32)
    h = jnp.maximum(h + b1_ref[...], 0.0)

    # --- deep layer 2 --------------------------------------------------------
    h = jnp.dot(h.astype(cdt), w2_ref[...],
                preferred_element_type=jnp.float32)
    h = jnp.maximum(h + b2_ref[...], 0.0)

    # --- heads, produced lane-dense as [1, bt] (batch on lanes) -------------
    dn = (((1,), (1,)), ((), ()))          # contract feature dims of both sides
    deep = lax.dot_general(head_ref[...], h, dn,
                           preferred_element_type=jnp.float32)
    wide = lax.dot_general(wide_ref[...], xd, dn,
                           preferred_element_type=jnp.float32)
    out_ref[...] = jax.nn.sigmoid(deep + wide + cst_ref[...])


# ------------------------ wrapper: fold parameters ------------------------- #
def fold_params(emb_tables, params, cate_fea_uniques, num_fea_size,
                *, use_bf16=True):
    """Fold embeddings, eval-BatchNorm and the 0.5 output scale into weights."""
    (wide_w, wide_b, w1, b1, s1, t1, w2, b2, s2, t2, wout, bout) = params
    n_cate = len(cate_fea_uniques)
    emb = emb_tables[0].shape[1]
    h1 = w1.shape[1]

    offs = np.concatenate([[0], np.cumsum(np.asarray(cate_fea_uniques))])
    tv = int(offs[-1])
    tvp = _round_up(max(tv, 128), 128)     # lane-dense multi-hot width

    # Embedding tables folded into the sparse slice of layer-1 weights.
    w1s = jnp.zeros((tvp, h1), jnp.float32)
    for i, tbl in enumerate(emb_tables):
        blk = tbl @ w1[i * emb:(i + 1) * emb, :]          # [V_i, h1]
        w1s = w1s.at[int(offs[i]):int(offs[i + 1]), :].set(blk)
    w1s = w1s * s1                                        # fold BN1 scale
    w1d = w1[n_cate * emb:, :] * s1                       # [nd, h1]

    cdt = jnp.bfloat16 if use_bf16 else jnp.float32
    return dict(
        offsets=jnp.asarray(offs[:-1], jnp.int32),        # [n_cate]
        w1s=w1s.astype(cdt),
        w1d=w1d.astype(cdt),
        b1=(b1 * s1 + t1).astype(jnp.float32),
        w2=(w2 * s2).astype(cdt),
        b2=(b2 * s2 + t2).astype(jnp.float32),
        head=(0.5 * wout).reshape(1, -1).astype(jnp.float32),
        wide=(0.5 * wide_w).reshape(1, -1).astype(jnp.float32),
        cst=(0.5 * (bout + wide_b)).reshape(1, 1).astype(jnp.float32),
    )


# ------------------------------ forward ----------------------------------- #
def widedeep_forward(x_sparse, x_dense, folded, *, b_tile=None):
    """x_sparse: [B, n_cate] int, x_dense: [B, nd] f32 -> [B, 1] f32."""
    B, n_cate = x_sparse.shape
    nd = x_dense.shape[1]

    # Offset sparse ids into the combined vocabulary (tiny, 24 B/row).
    sp = x_sparse.astype(jnp.int32) + folded["offsets"][None, :]
    xd = x_dense.astype(jnp.float32)

    # Batch tile: multiple of 128 so the [1, bt] output tile is lane-dense,
    # >=2 grid steps when B allows (both v7x TensorCores get work), capped at
    # 2048 rows/tile (VMEM stays far below the scoped budget).
    if b_tile is None:
        b_tile = min(2048,
                     max(128, _round_up(_cdiv(_round_up(B, 128), 2), 128)))
    else:
        b_tile = max(128, _round_up(b_tile, 128))
    B_pad = _round_up(B, b_tile)
    if B_pad != B:                          # skip the pad op when unnecessary
        sp = jnp.pad(sp, ((0, B_pad - B), (0, 0)))
        xd = jnp.pad(xd, ((0, B_pad - B), (0, 0)))

    def row_spec(width):
        return pl.BlockSpec((b_tile, width), lambda i: (i, 0))

    def rep_spec(a):
        # Whole-array parameter block, identical every grid step.
        # TODO(synk): single-buffer (pipeline_mode=pl.Buffered(1)) or stage into
        # scratch if hidden dims grow toward v7x's 64 MiB VMEM; noise at h=256/128.
        return pl.BlockSpec(a.shape, lambda i: (0,) * a.ndim)

    params = (folded["w1s"], folded["w1d"], folded["b1"],
              folded["w2"], folded["b2"],
              folded["head"], folded["wide"], folded["cst"])
    in_specs = [row_spec(n_cate), row_spec(nd)] + [rep_spec(a) for a in params]
    out_spec = pl.BlockSpec((1, b_tile), lambda i: (0, i))   # lane-dense output

    out = pl.pallas_call(
        widedeep_kernel,
        out_shape=jax.ShapeDtypeStruct((1, B_pad), jnp.float32),
        grid=(B_pad // b_tile,),
        in_specs=in_specs,
        out_specs=out_spec,
        compiler_params=pltpu.CompilerParams(
            dimension_semantics=("parallel",)),
    )(sp, xd, *params)
    return out.reshape(B_pad, 1)[:B]


# ------------------------- parameter construction ------------------------- #
def make_params(key, cate_fea_uniques, num_fea_size, emb_size, hidden_dims):
    keys = jax.random.split(key, 16)
    d0 = len(cate_fea_uniques) * emb_size + num_fea_size
    h1, h2 = hidden_dims
    eps = 1e-5

    emb_tables = [
        jax.random.normal(keys[i], (v, emb_size), jnp.float32)
        for i, v in enumerate(cate_fea_uniques)
    ]

    def lin(k, fin, fout):
        kw, kb = jax.random.split(k)
        w = jax.random.normal(kw, (fin, fout), jnp.float32) * 0.1
        b = jax.random.normal(kb, (1, fout), jnp.float32) * 0.1
        return w, b

    wide_w, wide_b = lin(keys[8], num_fea_size, 1)
    w1, b1 = lin(keys[9], d0, h1)
    w2, b2 = lin(keys[10], h1, h2)
    wout, bout = lin(keys[11], h2, 1)

    def bn_fold(k, dim):
        kg, kb2, km, kv = jax.random.split(k, 4)
        gamma = 1.0 + 0.1 * jax.random.normal(kg, (1, dim), jnp.float32)
        beta = 0.1 * jax.random.normal(kb2, (1, dim), jnp.float32)
        mean = 0.1 * jax.random.normal(km, (1, dim), jnp.float32)
        var = jnp.abs(jax.random.normal(kv, (1, dim), jnp.float32)) + 0.5
        scale = gamma / jnp.sqrt(var + eps)
        shift = beta - mean * scale
        return scale, shift

    s1, t1 = bn_fold(keys[12], h1)
    s2, t2 = bn_fold(keys[13], h2)

    params = (wide_w, wide_b, w1, b1, s1, t1, w2, b2, s2, t2, wout, bout)
    return emb_tables, params


# ----------------------------- pure-JAX ref -------------------------------- #
def widedeep_ref(x_sparse, x_dense, emb_tables, params):
    (wide_w, wide_b, w1, b1, s1, t1, w2, b2, s2, t2, wout, bout) = params
    sp = x_sparse.astype(jnp.int32)
    embs = [jnp.take(tbl, sp[:, i], axis=0) for i, tbl in enumerate(emb_tables)]
    x = jnp.concatenate(embs + [x_dense], axis=-1)
    wide = x_dense @ wide_w + wide_b
    h = jnp.maximum((x @ w1 + b1) * s1 + t1, 0.0)
    h = jnp.maximum((h @ w2 + b2) * s2 + t2, 0.0)
    deep = h @ wout + bout
    return jax.nn.sigmoid(0.5 * wide + 0.5 * deep)


# --------------------------------- main ------------------------------------ #
if __name__ == "__main__":
    key = jax.random.PRNGKey(0)
    k_param, k_sparse, k_dense = jax.random.split(key, 3)

    cate_fea_uniques = [10, 20, 30, 40, 50, 60]   # 6 sparse features
    num_fea_size = 16                             # dense features
    emb_size = 8
    hidden_dims = [256, 128]
    B = 256

    emb_tables, params = make_params(
        k_param, cate_fea_uniques, num_fea_size, emb_size, hidden_dims)

    x_sparse = jnp.stack(
        [jax.random.randint(jax.random.fold_in(k_sparse, i), (B,), 0, v)
         for i, v in enumerate(cate_fea_uniques)], axis=1)          # [B, 6]
    x_dense = jax.random.normal(k_dense, (B, num_fea_size), jnp.float32)

    ref = widedeep_ref(x_sparse, x_dense, emb_tables, params)

    # f32 path, default tiling (2 x 128-row tiles -> exercises multi-step grid)
    folded_f32 = fold_params(emb_tables, params, cate_fea_uniques,
                             num_fea_size, use_bf16=False)
    out = jax.block_until_ready(widedeep_forward(x_sparse, x_dense, folded_f32))
    np.testing.assert_allclose(np.asarray(out), np.asarray(ref),
                               rtol=1e-4, atol=1e-4)
    assert out.shape == (B, 1)

    # f32 path, single 256-row tile
    out_1t = jax.block_until_ready(
        widedeep_forward(x_sparse, x_dense, folded_f32, b_tile=256))
    np.testing.assert_allclose(np.asarray(out_1t), np.asarray(ref),
                               rtol=1e-4, atol=1e-4)

    # bf16 MXU path (default on all generations; wide head stays f32)
    folded_bf16 = fold_params(emb_tables, params, cate_fea_uniques,
                              num_fea_size, use_bf16=True)
    out_bf = jax.block_until_ready(
        widedeep_forward(x_sparse, x_dense, folded_bf16))
    np.testing.assert_allclose(np.asarray(out_bf), np.asarray(ref),
                               rtol=2e-2, atol=2e-2)

    print("KERNEL_OK")
</pallas_src>

<mosaic_0001>
module attributes {stable_mosaic.version = 11 : i64} {
  func.func @widedeep_kernel(%arg0: i32, %arg1: memref<128x6xi32, #tpu.memory_space<vmem>>, %arg2: memref<128x16xf32, #tpu.memory_space<vmem>>, %arg3: memref<256x256xf32, #tpu.memory_space<vmem>>, %arg4: memref<16x256xf32, #tpu.memory_space<vmem>>, %arg5: memref<1x256xf32, #tpu.memory_space<vmem>>, %arg6: memref<256x128xf32, #tpu.memory_space<vmem>>, %arg7: memref<1x128xf32, #tpu.memory_space<vmem>>, %arg8: memref<1x128xf32, #tpu.memory_space<vmem>>, %arg9: memref<1x16xf32, #tpu.memory_space<vmem>>, %arg10: memref<1x1xf32, #tpu.memory_space<vmem>>, %arg11: memref<1x128xf32, #tpu.memory_space<vmem>>) attributes {dimension_semantics = [#tpu.dimension_semantics<parallel>], iteration_bounds = array<i64: 2>, scalar_prefetch = 0 : i64, scratch_operands = 0 : i64, tpu.core_type = #tpu.core_type<tc>, window_params = [{transform_indices = @transform_0, window_bounds = array<i64: 128, 6>}, {transform_indices = @transform_1, window_bounds = array<i64: 128, 16>}, {pipeline_mode = #tpu.pipeline_mode<synchronous>, transform_indices = @transform_2, window_bounds = array<i64: 256, 256>}, {pipeline_mode = #tpu.pipeline_mode<synchronous>, transform_indices = @transform_3, window_bounds = array<i64: 16, 256>}, {pipeline_mode = #tpu.pipeline_mode<synchronous>, transform_indices = @transform_4, window_bounds = array<i64: 1, 256>}, {pipeline_mode = #tpu.pipeline_mode<synchronous>, transform_indices = @transform_5, window_bounds = array<i64: 256, 128>}, {pipeline_mode = #tpu.pipeline_mode<synchronous>, transform_indices = @transform_6, window_bounds = array<i64: 1, 128>}, {pipeline_mode = #tpu.pipeline_mode<synchronous>, transform_indices = @transform_7, window_bounds = array<i64: 1, 128>}, {pipeline_mode = #tpu.pipeline_mode<synchronous>, transform_indices = @transform_8, window_bounds = array<i64: 1, 16>}, {pipeline_mode = #tpu.pipeline_mode<synchronous>, transform_indices = @transform_9, window_bounds = array<i64: 1, 1>}, {transform_indices = @transform_10, window_bounds = array<i64: 1, 128>}]} {
    %c0 = arith.constant 0 : index
    %c0_0 = arith.constant 0 : index
    %0 = vector.load %arg1[%c0, %c0_0] : memref<128x6xi32, #tpu.memory_space<vmem>>, vector<128x6xi32>
    %c0_1 = arith.constant 0 : index
    %c0_2 = arith.constant 0 : index
    %1 = vector.load %arg2[%c0_1, %c0_2] : memref<128x16xf32, #tpu.memory_space<vmem>>, vector<128x16xf32>
    %2 = tpu.iota {dimensions = array<i32: 1>} : vector<128x256xi32>
    %cst = arith.constant 0.000000e+00 : f32
    %3 = vector.broadcast %cst : f32 to vector<128x256xf32>
    %4 = vector.extract_strided_slice %0 {offsets = [0, 0], sizes = [128, 1], strides = [1, 1]} : vector<128x6xi32> to vector<128x1xi32>
    %5 = vector.broadcast %4 : vector<128x1xi32> to vector<128x256xi32>
    %6 = arith.cmpi eq, %2, %5 : vector<128x256xi32>
    %cst_3 = arith.constant 1.000000e+00 : f32
    %7 = vector.broadcast %cst_3 : f32 to vector<128x256xf32>
    %8 = arith.select %6, %7, %3 : vector<128x256xi1>, vector<128x256xf32>
    %9 = vector.extract_strided_slice %0 {offsets = [0, 1], sizes = [128, 1], strides = [1, 1]} : vector<128x6xi32> to vector<128x1xi32>
    %10 = vector.broadcast %9 : vector<128x1xi32> to vector<128x256xi32>
    %11 = arith.cmpi eq, %2, %10 : vector<128x256xi32>
    %cst_4 = arith.constant 1.000000e+00 : f32
    %12 = vector.broadcast %cst_4 : f32 to vector<128x256xf32>
    %13 = arith.select %11, %12, %8 : vector<128x256xi1>, vector<128x256xf32>
    %14 = vector.extract_strided_slice %0 {offsets = [0, 2], sizes = [128, 1], strides = [1, 1]} : vector<128x6xi32> to vector<128x1xi32>
    %15 = vector.broadcast %14 : vector<128x1xi32> to vector<128x256xi32>
    %16 = arith.cmpi eq, %2, %15 : vector<128x256xi32>
    %cst_5 = arith.constant 1.000000e+00 : f32
    %17 = vector.broadcast %cst_5 : f32 to vector<128x256xf32>
    %18 = arith.select %16, %17, %13 : vector<128x256xi1>, vector<128x256xf32>
    %19 = vector.extract_strided_slice %0 {offsets = [0, 3], sizes = [128, 1], strides = [1, 1]} : vector<128x6xi32> to vector<128x1xi32>
    %20 = vector.broadcast %19 : vector<128x1xi32> to vector<128x256xi32>
    %21 = arith.cmpi eq, %2, %20 : vector<128x256xi32>
    %cst_6 = arith.constant 1.000000e+00 : f32
    %22 = vector.broadcast %cst_6 : f32 to vector<128x256xf32>
    %23 = arith.select %21, %22, %18 : vector<128x256xi1>, vector<128x256xf32>
    %24 = vector.extract_strided_slice %0 {offsets = [0, 4], sizes = [128, 1], strides = [1, 1]} : vector<128x6xi32> to vector<128x1xi32>
    %25 = vector.broadcast %24 : vector<128x1xi32> to vector<128x256xi32>
    %26 = arith.cmpi eq, %2, %25 : vector<128x256xi32>
    %cst_7 = arith.constant 1.000000e+00 : f32
    %27 = vector.broadcast %cst_7 : f32 to vector<128x256xf32>
    %28 = arith.select %26, %27, %23 : vector<128x256xi1>, vector<128x256xf32>
    %29 = vector.extract_strided_slice %0 {offsets = [0, 5], sizes = [128, 1], strides = [1, 1]} : vector<128x6xi32> to vector<128x1xi32>
    %30 = vector.broadcast %29 : vector<128x1xi32> to vector<128x256xi32>
    %31 = arith.cmpi eq, %2, %30 : vector<128x256xi32>
    %cst_8 = arith.constant 1.000000e+00 : f32
    %32 = vector.broadcast %cst_8 : f32 to vector<128x256xf32>
    %33 = arith.select %31, %32, %28 : vector<128x256xi1>, vector<128x256xf32>
    %c0_9 = arith.constant 0 : index
    %c0_10 = arith.constant 0 : index
    %34 = vector.load %arg3[%c0_9, %c0_10] : memref<256x256xf32, #tpu.memory_space<vmem>>, vector<256x256xf32>
    %cst_11 = arith.constant dense<0.000000e+00> : vector<128x256xf32>
    %35 = tpu.matmul %33, %34, %cst_11 {dimension_numbers = #tpu.dot_dimension_numbers<[1], [0], [0], [1], [0, 0, 1, 1], [], []>} : vector<128x256xf32>, vector<256x256xf32>, vector<128x256xf32> -> vector<128x256xf32>
    %c0_12 = arith.constant 0 : index
    %c0_13 = arith.constant 0 : index
    %36 = vector.load %arg4[%c0_12, %c0_13] : memref<16x256xf32, #tpu.memory_space<vmem>>, vector<16x256xf32>
    %cst_14 = arith.constant dense<0.000000e+00> : vector<128x256xf32>
    %37 = tpu.matmul %1, %36, %cst_14 {dimension_numbers = #tpu.dot_dimension_numbers<[1], [0], [0], [1], [0, 0, 1, 1], [], []>} : vector<128x16xf32>, vector<16x256xf32>, vector<128x256xf32> -> vector<128x256xf32>
    %38 = arith.addf %35, %37 : vector<128x256xf32>
    %c0_15 = arith.constant 0 : index
    %c0_16 = arith.constant 0 : index
    %39 = vector.load %arg5[%c0_15, %c0_16] : memref<1x256xf32, #tpu.memory_space<vmem>>, vector<1x256xf32>
    %40 = vector.broadcast %39 : vector<1x256xf32> to vector<128x256xf32>
    %41 = arith.addf %38, %40 : vector<128x256xf32>
    %cst_17 = arith.constant 0.000000e+00 : f32
    %42 = vector.broadcast %cst_17 : f32 to vector<128x256xf32>
    %43 = arith.maximumf %41, %42 : vector<128x256xf32>
    %c0_18 = arith.constant 0 : index
    %c0_19 = arith.constant 0 : index
    %44 = vector.load %arg6[%c0_18, %c0_19] : memref<256x128xf32, #tpu.memory_space<vmem>>, vector<256x128xf32>
    %cst_20 = arith.constant dense<0.000000e+00> : vector<128x128xf32>
    %45 = tpu.matmul %43, %44, %cst_20 {dimension_numbers = #tpu.dot_dimension_numbers<[1], [0], [0], [1], [0, 0, 1, 1], [], []>} : vector<128x256xf32>, vector<256x128xf32>, vector<128x128xf32> -> vector<128x128xf32>
    %c0_21 = arith.constant 0 : index
    %c0_22 = arith.constant 0 : index
    %46 = vector.load %arg7[%c0_21, %c0_22] : memref<1x128xf32, #tpu.memory_space<vmem>>, vector<1x128xf32>
    %47 = vector.broadcast %46 : vector<1x128xf32> to vector<128x128xf32>
    %48 = arith.addf %45, %47 : vector<128x128xf32>
    %cst_23 = arith.constant 0.000000e+00 : f32
    %49 = vector.broadcast %cst_23 : f32 to vector<128x128xf32>
    %50 = arith.maximumf %48, %49 : vector<128x128xf32>
    %c0_24 = arith.constant 0 : index
    %c0_25 = arith.constant 0 : index
    %51 = vector.load %arg8[%c0_24, %c0_25] : memref<1x128xf32, #tpu.memory_space<vmem>>, vector<1x128xf32>
    %cst_26 = arith.constant dense<0.000000e+00> : vector<1x128xf32>
    %52 = tpu.matmul %51, %50, %cst_26 {dimension_numbers = #tpu.dot_dimension_numbers<[1], [1], [0], [0], [0, 0, 1, 0], [], []>} : vector<1x128xf32>, vector<128x128xf32>, vector<1x128xf32> -> vector<1x128xf32>
    %c0_27 = arith.constant 0 : index
    %c0_28 = arith.constant 0 : index
    %53 = vector.load %arg9[%c0_27, %c0_28] : memref<1x16xf32, #tpu.memory_space<vmem>>, vector<1x16xf32>
    %cst_29 = arith.constant dense<0.000000e+00> : vector<1x128xf32>
    %54 = tpu.matmul %53, %1, %cst_29 {dimension_numbers = #tpu.dot_dimension_numbers<[1], [1], [0], [0], [0, 0, 1, 0], [], []>} : vector<1x16xf32>, vector<128x16xf32>, vector<1x128xf32> -> vector<1x128xf32>
    %55 = arith.addf %52, %54 : vector<1x128xf32>
    %c0_30 = arith.constant 0 : index
    %c0_31 = arith.constant 0 : index
    %56 = vector.load %arg10[%c0_30, %c0_31] : memref<1x1xf32, #tpu.memory_space<vmem>>, vector<1x1xf32>
    %57 = vector.broadcast %56 : vector<1x1xf32> to vector<1x128xf32>
    %58 = arith.addf %55, %57 : vector<1x128xf32>
    %59 = arith.negf %58 : vector<1x128xf32>
    %60 = math.exp %59 : vector<1x128xf32>
    %cst_32 = arith.constant 1.000000e+00 : f32
    %61 = vector.broadcast %cst_32 : f32 to vector<1x128xf32>
    %62 = arith.addf %61, %60 : vector<1x128xf32>
    %63 = arith.divf %61, %62 : vector<1x128xf32>
    %c0_33 = arith.constant 0 : index
    %c0_34 = arith.constant 0 : index
    %64 = vector.load %arg11[%c0_33, %c0_34] : memref<1x128xf32, #tpu.memory_space<vmem>>, vector<1x128xf32>
    tpu.vector_store %arg11[%c0_33, %c0_34], %63 {strides = array<i32>} : memref<1x128xf32, #tpu.memory_space<vmem>>, vector<1x128xf32>,
    return
  }
  func.func @transform_0(%arg0: i32) -> (i32, i32) {
    %c0_i32 = arith.constant 0 : i32
    %c0_i32_0 = arith.constant 0 : i32
    return %arg0, %c0_i32 : i32, i32
  }
  func.func @transform_1(%arg0: i32) -> (i32, i32) {
    %c0_i32 = arith.constant 0 : i32
    %c0_i32_0 = arith.constant 0 : i32
    return %arg0, %c0_i32 : i32, i32
  }
  func.func @transform_2(%arg0: i32) -> (i32, i32) {
    %c0_i32 = arith.constant 0 : i32
    %c0_i32_0 = arith.constant 0 : i32
    %c0_i32_1 = arith.constant 0 : i32
    return %c0_i32, %c0_i32_0 : i32, i32
  }
  func.func @transform_3(%arg0: i32) -> (i32, i32) {
    %c0_i32 = arith.constant 0 : i32
    %c0_i32_0 = arith.constant 0 : i32
    %c0_i32_1 = arith.constant 0 : i32
    return %c0_i32, %c0_i32_0 : i32, i32
  }
  func.func @transform_4(%arg0: i32) -> (i32, i32) {
    %c0_i32 = arith.constant 0 : i32
    %c0_i32_0 = arith.constant 0 : i32
    %c0_i32_1 = arith.constant 0 : i32
    return %c0_i32, %c0_i32_0 : i32, i32
  }
  func.func @transform_5(%arg0: i32) -> (i32, i32) {
    %c0_i32 = arith.constant 0 : i32
    %c0_i32_0 = arith.constant 0 : i32
    %c0_i32_1 = arith.constant 0 : i32
    return %c0_i32, %c0_i32_0 : i32, i32
  }
  func.func @transform_6(%arg0: i32) -> (i32, i32) {
    %c0_i32 = arith.constant 0 : i32
    %c0_i32_0 = arith.constant 0 : i32
    %c0_i32_1 = arith.constant 0 : i32
    return %c0_i32, %c0_i32_0 : i32, i32
  }
  func.func @transform_7(%arg0: i32) -> (i32, i32) {
    %c0_i32 = arith.constant 0 : i32
    %c0_i32_0 = arith.constant 0 : i32
    %c0_i32_1 = arith.constant 0 : i32
    return %c0_i32, %c0_i32_0 : i32, i32
  }
  func.func @transform_8(%arg0: i32) -> (i32, i32) {
    %c0_i32 = arith.constant 0 : i32
    %c0_i32_0 = arith.constant 0 : i32
    %c0_i32_1 = arith.constant 0 : i32
    return %c0_i32, %c0_i32_0 : i32, i32
  }
  func.func @transform_9(%arg0: i32) -> (i32, i32) {
    %c0_i32 = arith.constant 0 : i32
    %c0_i32_0 = arith.constant 0 : i32
    %c0_i32_1 = arith.constant 0 : i32
    return %c0_i32, %c0_i32_0 : i32, i32
  }
  func.func @transform_10(%arg0: i32) -> (i32, i32) {
    %c0_i32 = arith.constant 0 : i32
    %c0_i32_0 = arith.constant 0 : i32
    return %c0_i32, %arg0 : i32, i32
  }
}

</mosaic_0001>

<llo_original>
// kernel: tpu_custom_call.1
$region0: #{tpu_custom_call.1}
  #allocation0 [shape = 'u32[]', space=smem, size = 0x4, offset = 0x4, fixed_abs, tag = 'smem constant byte address 0x4 - core index']
  #allocation1 [shape = 'u32[144,128]{1,0:T(1,128)}', space=vmem, size = 0x12000, scoped, tag = 'internal scratch']
  #allocation2 [shape = 'f32[1,1]{1,0:T(1,128)S(1)}', space=vmem, size = 0x200, scoped, tag = 'scoped memory for tpu_custom_call.1']
  %s0 = inlined_call_operand.vmem [shape: s32[256,6], index: 0, kind: input, shape index: {}]
  %s1 = inlined_call_operand.vmem [shape: f32[256,16], index: 1, kind: input, shape index: {}]
  %s2 = inlined_call_operand.vmem [shape: f32[256,256], index: 2, kind: input, shape index: {}]
  %s3 = inlined_call_operand.vmem [shape: f32[16,256], index: 3, kind: input, shape index: {}]
  %s4 = inlined_call_operand.vmem [shape: f32[1,256], index: 4, kind: input, shape index: {}]
  %s5 = inlined_call_operand.hbm [shape: f32[256,128], index: 5, kind: input, shape index: {}]
  %s6 = inlined_call_operand.vmem [shape: f32[1,128], index: 6, kind: input, shape index: {}]
  %s7 = inlined_call_operand.vmem [shape: f32[1,128], index: 7, kind: input, shape index: {}]
  %s8 = inlined_call_operand.vmem [shape: f32[1,16], index: 8, kind: input, shape index: {}]
  %s9 = inlined_call_operand.<no memory space> [shape: f32[1,1], index: 9, kind: input, shape index: {}]
  %s10 = inlined_call_operand.hbm [shape: f32[1,256], index: 10, kind: output, shape index: {}]
  %s11 = sld [smem:[#allocation0]]
  $region77: #{tpu_custom_call.1} parent=0
    _
  %s13 = ssub.s32 1, %s11
  %s14 = scalar_select 0, %s13, %s11
  %v15 = vstv %s9
  %16 = vst [vmem:[#allocation2] sm:$0x1] %v15
  $region1: #{tpu_custom_call.1} parent=0
    #allocation3 [shape = 'u8[131072]{0}', space=vmem, size = 0x20000, scoped, tag = 'input window, operand 5, single buffered']
    #allocation4 [shape = 's32[2]{0}', space=sflag, size = 0x8, scoped, tag = 'scoped memory for tpu_custom_call.1']
    #allocation5 [shape = 's32[2]{0}', space=sflag, size = 0x8, scoped, tag = 'scoped memory for tpu_custom_call.1']
    #allocation6 [shape = 'u8[1024]{0}', space=vmem, size = 0x400, scoped, tag = 'output window, operand 0']
    %17 = vsyncpa [#allocation4], 0
    %18 = vsyncpa [#allocation5], 0
    %s19 = scalar_lea.sflag [#allocation5], 1
    %20 = vsyncpa %s19, 0
    loop: start=0, step=1, limit=4
    $region2: #{tpu_custom_call.1} parent=1 // loop_pre_header
      _
    $region3: #{tpu_custom_call.1} parent=1 // loop_header
      %s22 = sphi 0, %s26
      %p23 = scmp.ge.s32.totalorder %s22, 4
      %s32 = sphi 0, %s34
      %s35 = sphi 0, %s32
      %s36 = sphi 0, %s35
      %s52 = sphi 0, %s36
      %s58 = sphi 0, %s60
      %s61 = sphi 0, %s58
      %s62 = sphi 0, %s61
      %s78 = sphi 0, %s62
      %s82 = sphi 0, %s82
      %s84 = sphi 0, %s82
      %s85 = sphi 0, %s84
      %s99 = sphi 0, %s85
      %s103 = sphi 0, %s103
      %s105 = sphi 0, %s103
      %s106 = sphi 0, %s105
      %s120 = sphi 0, %s106
      %s124 = sphi 0, %s124
      %s126 = sphi 0, %s124
      %s127 = sphi 0, %s126
      %s141 = sphi 0, %s127
      %s145 = sphi 0, %s145
      %s147 = sphi 0, %s145
      %s148 = sphi 0, %s147
      %s162 = sphi 0, %s148
      %s166 = sphi 0, %s166
      %s168 = sphi 0, %s166
      %s169 = sphi 0, %s168
      %s183 = sphi 0, %s169
      %s187 = sphi 0, %s187
      %s189 = sphi 0, %s187
      %s190 = sphi 0, %s189
      %s204 = sphi 0, %s190
      %s208 = sphi 0, %s208
      %s210 = sphi 0, %s208
      %s211 = sphi 0, %s210
      %s225 = sphi 0, %s211
      %s229 = sphi 0, %s229
      %s231 = sphi 0, %s229
      %s232 = sphi 0, %s231
      %s246 = sphi 0, %s232
      %s252 = sphi 0, %s254
      %s255 = sphi 0, %s252
      %s256 = sphi 0, %s255
      %s272 = sphi 0, %s256
    $region4: #{tpu_custom_call.1} parent=1 // loop_header_branch
      %25 = sbr.rel (%p23) target = $region8
    $region5: #{tpu_custom_call.1} parent=1 // loop_body
      %s27 = ssub.s32 %s22, 1
      %s28 = ssub.s32 %s22, 2
      %s29 = sadd.s32 %s22, 1
      %s30 = ssub.s32 %s22, %s29
      %p31 = scmp.eq.s32.totalorder %s30, 0
      %s33 = sadd.s32 %s32, 1
      %s34 = scalar_select %p31, %s32, %s33
      %p37 = pneg %p31
      %p38 = scmp.eq.s32.totalorder %s22, 1
      %p39 = por %p37, %p38
      %p40 = scmp.ne.s32.totalorder %s32, %s35
      %p41 = scmp.eq.s32.totalorder %s22, 0
      %p42 = por %p40, %p41
      %p43 = scmp.ne.s32.totalorder %s32, %s35
      %p44 = scmp.eq.s32.totalorder %s27, 1
      %p45 = por %p43, %p44
      %p46 = scmp.ne.s32.totalorder %s35, %s36
      %p47 = scmp.eq.s32.totalorder %s27, 0
      %p48 = por %p46, %p47
      %p49 = scmp.ne.s32.totalorder %s35, %s36
      %p50 = scmp.eq.s32.totalorder %s28, 1
      %p51 = por %p49, %p50
      %p53 = scmp.ne.s32.totalorder %s36, %s52
      %p54 = scmp.eq.s32.totalorder %s28, 0
      %p55 = por %p53, %p54
      %s56 = ssub.s32 %s22, %s29
      %p57 = scmp.eq.s32.totalorder %s56, 0
      %s59 = sadd.s32 %s58, 1
      %s60 = scalar_select %p57, %s58, %s59
      %p63 = pneg %p57
      %p64 = scmp.eq.s32.totalorder %s22, 1
      %p65 = por %p63, %p64
      %p66 = scmp.ne.s32.totalorder %s58, %s61
      %p67 = scmp.eq.s32.totalorder %s22, 0
      %p68 = por %p66, %p67
      %p69 = scmp.ne.s32.totalorder %s58, %s61
      %p70 = scmp.eq.s32.totalorder %s27, 1
      %p71 = por %p69, %p70
      %p72 = scmp.ne.s32.totalorder %s61, %s62
      %p73 = scmp.eq.s32.totalorder %s27, 0
      %p74 = por %p72, %p73
      %p75 = scmp.ne.s32.totalorder %s61, %s62
      %p76 = scmp.eq.s32.totalorder %s28, 1
      %p77 = por %p75, %p76
      %p79 = scmp.ne.s32.totalorder %s62, %s78
      %p80 = scmp.eq.s32.totalorder %s28, 0
      %p81 = por %p79, %p80
      %s83 = sadd.s32 %s82, 1
      %p86 = scmp.eq.s32.totalorder %s22, 1
      %p87 = scmp.ne.s32.totalorder %s82, %s84
      %p88 = scmp.eq.s32.totalorder %s22, 0
      %p89 = por %p87, %p88
      %p90 = scmp.ne.s32.totalorder %s82, %s84
      %p91 = scmp.eq.s32.totalorder %s27, 1
      %p92 = por %p90, %p91
      %p93 = scmp.ne.s32.totalorder %s84, %s85
      %p94 = scmp.eq.s32.totalorder %s27, 0
      %p95 = por %p93, %p94
      %p96 = scmp.ne.s32.totalorder %s84, %s85
      %p97 = scmp.eq.s32.totalorder %s28, 1
      %p98 = por %p96, %p97
      %p100 = scmp.ne.s32.totalorder %s85, %s99
      %p101 = scmp.eq.s32.totalorder %s28, 0
      %p102 = por %p100, %p101
      %s104 = sadd.s32 %s103, 1
      %p107 = scmp.eq.s32.totalorder %s22, 1
      %p108 = scmp.ne.s32.totalorder %s103, %s105
      %p109 = scmp.eq.s32.totalorder %s22, 0
      %p110 = por %p108, %p109
      %p111 = scmp.ne.s32.totalorder %s103, %s105
      %p112 = scmp.eq.s32.totalorder %s27, 1
      %p113 = por %p111, %p112
      %p114 = scmp.ne.s32.totalorder %s105, %s106
      %p115 = scmp.eq.s32.totalorder %s27, 0
      %p116 = por %p114, %p115
      %p117 = scmp.ne.s32.totalorder %s105, %s106
      %p118 = scmp.eq.s32.totalorder %s28, 1
      %p119 = por %p117, %p118
      %p121 = scmp.ne.s32.totalorder %s106, %s120
      %p122 = scmp.eq.s32.totalorder %s28, 0
      %p123 = por %p121, %p122
      %s125 = sadd.s32 %s124, 1
      %p128 = scmp.eq.s32.totalorder %s22, 1
      %p129 = scmp.ne.s32.totalorder %s124, %s126
      %p130 = scmp.eq.s32.totalorder %s22, 0
      %p131 = por %p129, %p130
      %p132 = scmp.ne.s32.totalorder %s124, %s126
      %p133 = scmp.eq.s32.totalorder %s27, 1
      %p134 = por %p132, %p133
      %p135 = scmp.ne.s32.totalorder %s126, %s127
      %p136 = scmp.eq.s32.totalorder %s27, 0
      %p137 = por %p135, %p136
      %p138 = scmp.ne.s32.totalorder %s126, %s127
      %p139 = scmp.eq.s32.totalorder %s28, 1
      %p140 = por %p138, %p139
      %p142 = scmp.ne.s32.totalorder %s127, %s141
      %p143 = scmp.eq.s32.totalorder %s28, 0
      %p144 = por %p142, %p143
      %s146 = sadd.s32 %s145, 1
      %p149 = scmp.eq.s32.totalorder %s22, 1
      %p150 = scmp.ne.s32.totalorder %s145, %s147
      %p151 = scmp.eq.s32.totalorder %s22, 0
      %p152 = por %p150, %p151
      %p153 = scmp.ne.s32.totalorder %s145, %s147
      %p154 = scmp.eq.s32.totalorder %s27, 1
      %p155 = por %p153, %p154
      %p156 = scmp.ne.s32.totalorder %s147, %s148
      %p157 = scmp.eq.s32.totalorder %s27, 0
      %p158 = por %p156, %p157
      %p159 = scmp.ne.s32.totalorder %s147, %s148
      %p160 = scmp.eq.s32.totalorder %s28, 1
      %p161 = por %p159, %p160
      %p163 = scmp.ne.s32.totalorder %s148, %s162
      %p164 = scmp.eq.s32.totalorder %s28, 0
      %p165 = por %p163, %p164
      %s167 = sadd.s32 %s166, 1
      %p170 = scmp.eq.s32.totalorder %s22, 1
      %p171 = scmp.ne.s32.totalorder %s166, %s168
      %p172 = scmp.eq.s32.totalorder %s22, 0
      %p173 = por %p171, %p172
      %p174 = scmp.ne.s32.totalorder %s166, %s168
      %p175 = scmp.eq.s32.totalorder %s27, 1
      %p176 = por %p174, %p175
      %p177 = scmp.ne.s32.totalorder %s168, %s169
      %p178 = scmp.eq.s32.totalorder %s27, 0
      %p179 = por %p177, %p178
      %p180 = scmp.ne.s32.totalorder %s168, %s169
      %p181 = scmp.eq.s32.totalorder %s28, 1
      %p182 = por %p180, %p181
      %p184 = scmp.ne.s32.totalorder %s169, %s183
      %p185 = scmp.eq.s32.totalorder %s28, 0
      %p186 = por %p184, %p185
      %s188 = sadd.s32 %s187, 1
      %p191 = scmp.eq.s32.totalorder %s22, 1
      %p192 = scmp.ne.s32.totalorder %s187, %s189
      %p193 = scmp.eq.s32.totalorder %s22, 0
      %p194 = por %p192, %p193
      %p195 = scmp.ne.s32.totalorder %s187, %s189
      %p196 = scmp.eq.s32.totalorder %s27, 1
      %p197 = por %p195, %p196
      %p198 = scmp.ne.s32.totalorder %s189, %s190
      %p199 = scmp.eq.s32.totalorder %s27, 0
      %p200 = por %p198, %p199
      %p201 = scmp.ne.s32.totalorder %s189, %s190
      %p202 = scmp.eq.s32.totalorder %s28, 1
      %p203 = por %p201, %p202
      %p205 = scmp.ne.s32.totalorder %s190, %s204
      %p206 = scmp.eq.s32.totalorder %s28, 0
      %p207 = por %p205, %p206
      %s209 = sadd.s32 %s208, 1
      %p212 = scmp.eq.s32.totalorder %s22, 1
      %p213 = scmp.ne.s32.totalorder %s208, %s210
      %p214 = scmp.eq.s32.totalorder %s22, 0
      %p215 = por %p213, %p214
      %p216 = scmp.ne.s32.totalorder %s208, %s210
      %p217 = scmp.eq.s32.totalorder %s27, 1
      %p218 = por %p216, %p217
      %p219 = scmp.ne.s32.totalorder %s210, %s211
      %p220 = scmp.eq.s32.totalorder %s27, 0
      %p221 = por %p219, %p220
      %p222 = scmp.ne.s32.totalorder %s210, %s211
      %p223 = scmp.eq.s32.totalorder %s28, 1
      %p224 = por %p222, %p223
      %p226 = scmp.ne.s32.totalorder %s211, %s225
      %p227 = scmp.eq.s32.totalorder %s28, 0
      %p228 = por %p226, %p227
      %s230 = sadd.s32 %s229, 1
      %p233 = scmp.eq.s32.totalorder %s22, 1
      %p234 = scmp.ne.s32.totalorder %s229, %s231
      %p235 = scmp.eq.s32.totalorder %s22, 0
      %p236 = por %p234, %p235
      %p237 = scmp.ne.s32.totalorder %s229, %s231
      %p238 = scmp.eq.s32.totalorder %s27, 1
      %p239 = por %p237, %p238
      %p240 = scmp.ne.s32.totalorder %s231, %s232
      %p241 = scmp.eq.s32.totalorder %s27, 0
      %p242 = por %p240, %p241
      %p243 = scmp.ne.s32.totalorder %s231, %s232
      %p244 = scmp.eq.s32.totalorder %s28, 1
      %p245 = por %p243, %p244
      %p247 = scmp.ne.s32.totalorder %s232, %s246
      %p248 = scmp.eq.s32.totalorder %s28, 0
      %p249 = por %p247, %p248
      %s250 = ssub.s32 %s22, %s29
      %p251 = scmp.eq.s32.totalorder %s250, 0
      %s253 = sadd.s32 %s252, 1
      %s254 = scalar_select %p251, %s252, %s253
      %p257 = pneg %p251
      %p258 = scmp.eq.s32.totalorder %s22, 1
      %p259 = por %p257, %p258
      %p260 = scmp.ne.s32.totalorder %s252, %s255
      %p261 = scmp.eq.s32.totalorder %s22, 0
      %p262 = por %p260, %p261
      %p263 = scmp.ne.s32.totalorder %s252, %s255
      %p264 = scmp.eq.s32.totalorder %s27, 1
      %p265 = por %p263, %p264
      %p266 = scmp.ne.s32.totalorder %s255, %s256
      %p267 = scmp.eq.s32.totalorder %s27, 0
      %p268 = por %p266, %p267
      %p269 = scmp.ne.s32.totalorder %s255, %s256
      %p270 = scmp.eq.s32.totalorder %s28, 1
      %p271 = por %p269, %p270
      %p273 = scmp.ne.s32.totalorder %s256, %s272
      %p274 = scmp.eq.s32.totalorder %s28, 0
      %p275 = por %p273, %p274
      %p276 = scmp.le.s32.totalorder 1, %s22
      %p277 = scmp.lt.s32.totalorder %s22, 3
      %p278 = pnand %p276, %p277
      %p279 = pneg %p278
      // Predicated region
      $region9: #{tpu_custom_call.1} parent=5 // pred_check
        _
      $region10: #{tpu_custom_call.1} parent=5 // pred_check_branch
        %281 = sbr.rel (%p278) target = $region12
      $region11: #{tpu_custom_call.1} parent=5 // pred_region
        %s282 = ssub.s32 %s22, 1
        // Predicated region
        $region13: #{tpu_custom_call.1} parent=11 // pred_check
          %p283 = pneg %p95
        $region14: #{tpu_custom_call.1} parent=11 // pred_check_branch
          %285 = sbr.rel (%p283) target = $region16
        $region15: #{tpu_custom_call.1} parent=11 // pred_region
          _
        $region16: #{tpu_custom_call.1} parent=11 // pred_fallthru
          _
        // Predicated region
        $region17: #{tpu_custom_call.1} parent=11 // pred_check
          %p286 = pneg %p116
        $region18: #{tpu_custom_call.1} parent=11 // pred_check_branch
          %288 = sbr.rel (%p286) target = $region20
        $region19: #{tpu_custom_call.1} parent=11 // pred_region
          _
        $region20: #{tpu_custom_call.1} parent=11 // pred_fallthru
          _
        // Predicated region
        $region21: #{tpu_custom_call.1} parent=11 // pred_check
          %p289 = pneg %p137
        $region22: #{tpu_custom_call.1} parent=11 // pred_check_branch
          %291 = sbr.rel (%p289) target = $region24
        $region23: #{tpu_custom_call.1} parent=11 // pred_region
          _
        $region24: #{tpu_custom_call.1} parent=11 // pred_fallthru
          _
        // Predicated region
        $region25: #{tpu_custom_call.1} parent=11 // pred_check
          %p292 = pneg %p158
        $region26: #{tpu_custom_call.1} parent=11 // pred_check_branch
          %294 = sbr.rel (%p292) target = $region28
        $region27: #{tpu_custom_call.1} parent=11 // pred_region
          %s296 = ssub.s32 4096, 4096
          %297 = vsyncadd [#allocation4], %s296
          %s298 = sshll.u32 [#allocation3], 4
          %s299 = int_to_ptr.vmem [resolvable:$true] %s298
          %304 = dma.hbm_to_vmem [thread:$0]  %s5, 4096, %s299, [#allocation4], 128, 128, 8
        $region28: #{tpu_custom_call.1} parent=11 // pred_fallthru
          _
        // Predicated region
        $region29: #{tpu_custom_call.1} parent=11 // pred_check
          %p305 = pneg %p179
        $region30: #{tpu_custom_call.1} parent=11 // pred_check_branch
          %307 = sbr.rel (%p305) target = $region32
        $region31: #{tpu_custom_call.1} parent=11 // pred_region
          _
        $region32: #{tpu_custom_call.1} parent=11 // pred_fallthru
          _
        // Predicated region
        $region33: #{tpu_custom_call.1} parent=11 // pred_check
          %p308 = pneg %p200
        $region34: #{tpu_custom_call.1} parent=11 // pred_check_branch
          %310 = sbr.rel (%p308) target = $region36
        $region35: #{tpu_custom_call.1} parent=11 // pred_region
          _
        $region36: #{tpu_custom_call.1} parent=11 // pred_fallthru
          _
        // Predicated region
        $region37: #{tpu_custom_call.1} parent=11 // pred_check
          %p311 = pneg %p221
        $region38: #{tpu_custom_call.1} parent=11 // pred_check_branch
          %313 = sbr.rel (%p311) target = $region40
        $region39: #{tpu_custom_call.1} parent=11 // pred_region
          _
        $region40: #{tpu_custom_call.1} parent=11 // pred_fallthru
          _
        // Predicated region
        $region41: #{tpu_custom_call.1} parent=11 // pred_check
          %p314 = pneg %p242
        $region42: #{tpu_custom_call.1} parent=11 // pred_check_branch
          %316 = sbr.rel (%p314) target = $region44
        $region43: #{tpu_custom_call.1} parent=11 // pred_region
          _
        $region44: #{tpu_custom_call.1} parent=11 // pred_fallthru
          _
      $region12: #{tpu_custom_call.1} parent=5 // pred_fallthru
        _
      %p317 = scmp.lt.s32.totalorder %s22, 2
      // Predicated region
      $region45: #{tpu_custom_call.1} parent=5 // pred_check
        %p318 = pneg %p317
      $region46: #{tpu_custom_call.1} parent=5 // pred_check_branch
        %320 = sbr.rel (%p318) target = $region48
      $region47: #{tpu_custom_call.1} parent=5 // pred_region
        // Predicated region
        $region49: #{tpu_custom_call.1} parent=47 // pred_check
          %p321 = pneg %p42
        $region50: #{tpu_custom_call.1} parent=47 // pred_check_branch
          %323 = sbr.rel (%p321) target = $region52
        $region51: #{tpu_custom_call.1} parent=47 // pred_region
          %s324 = smul.u32 16, %s22
          %p325 = scmp.lt.s32.totalorder %s324, 31
          %s326 = scalar_select %p325, %s324, 31
          %s327 = smul.addr %s326, 8
          %s328 = scalar_lea.vmem %s0, %s327
          %s329 = smul.u32 16, %s22
        $region52: #{tpu_custom_call.1} parent=47 // pred_fallthru
          _
        // Predicated region
        $region53: #{tpu_custom_call.1} parent=47 // pred_check
          %p330 = pneg %p68
        $region54: #{tpu_custom_call.1} parent=47 // pred_check_branch
          %332 = sbr.rel (%p330) target = $region56
        $region55: #{tpu_custom_call.1} parent=47 // pred_region
          %s333 = smul.u32 16, %s22
          %p334 = scmp.lt.s32.totalorder %s333, 31
          %s335 = scalar_select %p334, %s333, 31
          %s336 = smul.addr %s335, 8
          %s337 = scalar_lea.vmem %s1, %s336
          %s338 = smul.u32 16, %s22
        $region56: #{tpu_custom_call.1} parent=47 // pred_fallthru
          _
      $region48: #{tpu_custom_call.1} parent=5 // pred_fallthru
        _
      %p339 = scmp.le.s32.totalorder 1, %s22
      %p340 = scmp.lt.s32.totalorder %s22, 3
      %p341 = pnand %p339, %p340
      %p342 = pneg %p341
      // Predicated region
      $region57: #{tpu_custom_call.1} parent=5 // pred_check
        _
      $region58: #{tpu_custom_call.1} parent=5 // pred_check_branch
        %344 = sbr.rel (%p341) target = $region60
      $region59: #{tpu_custom_call.1} parent=5 // pred_region
        %s345 = ssub.s32 %s22, 1
        // Predicated region
        $region61: #{tpu_custom_call.1} parent=59 // pred_check
          %p346 = pneg %p158
        $region62: #{tpu_custom_call.1} parent=59 // pred_check_branch
          %348 = sbr.rel (%p346) target = $region64
        $region63: #{tpu_custom_call.1} parent=59 // pred_region
          %349 = dma.done [#allocation4], 4096
        $region64: #{tpu_custom_call.1} parent=59 // pred_fallthru
          _
        %s350 = smul.u32 16, %s27
        %p351 = scmp.lt.s32.totalorder %s350, 31
        %s352 = scalar_select %p351, %s350, 31
        %s353 = smul.addr %s352, 8
        %s354 = scalar_lea.vmem %s0, %s353
        %p355 = pneg %p48
        %p356 = pneg %p45
        %s357 = smul.u32 16, %s27
        %p358 = scmp.lt.s32.totalorder %s357, 31
        %s359 = scalar_select %p358, %s357, 31
        %s360 = smul.addr %s359, 8
        %s361 = scalar_lea.vmem %s1, %s360
        %p362 = pneg %p74
        %p363 = pneg %p71
        %p364 = pneg %p95
        %p365 = pneg %p92
        %p366 = pneg %p116
        %p367 = pneg %p113
        %p368 = pneg %p137
        %p369 = pneg %p134
        %p370 = pneg %p158
        %p371 = pneg %p155
        %p372 = pneg %p179
        %p373 = pneg %p176
        %p374 = pneg %p200
        %p375 = pneg %p197
        %p376 = pneg %p221
        %p377 = pneg %p218
        %p378 = pneg %p242
        %p379 = pneg %p239
        %p380 = pneg %p268
        %p381 = pneg %p265
        %s382 = sand.u32 %s255, 1
        %s383 = scalar_lea.sflag [#allocation5], %s382
        %s384 = sand.u32 %s255, 1
        %s385 = scalar_lea.vmem [#allocation6], %s384
        %s386 = smul.u32 16, %s27
        %p387 = scmp.lt.s32.totalorder %s386, 31
        %s388 = scalar_select %p387, %s386, 31
        %s389 = smul.addr %s388, 8
        %s390 = scalar_lea.vmem %s0, %s389
        %s391 = smul.u32 16, %s27
        %s392 = smul.u32 16, %s27
        %p393 = scmp.lt.s32.totalorder %s392, 31
        %s394 = scalar_select %p393, %s392, 31
        %s395 = smul.addr %s394, 8
        %s396 = scalar_lea.vmem %s1, %s395
        %s397 = smul.u32 16, %s27
        %v398 = vld [vmem:[%s390] sm:$0xff]
        %v399 = vld [vmem:[%s390 + $0x8] sm:$0xff]
        %v400 = vld [vmem:[%s390 + $0x10] sm:$0xff]
        %v401 = vld [vmem:[%s390 + $0x18] sm:$0xff]
        %v402 = vld [vmem:[%s390 + $0x20] sm:$0xff]
        %v403 = vld [vmem:[%s390 + $0x28] sm:$0xff]
        %v404 = vld [vmem:[%s390 + $0x30] sm:$0xff]
        %v405 = vld [vmem:[%s390 + $0x38] sm:$0xff]
        %v406 = vld [vmem:[%s390 + $0x40] sm:$0xff]
        %v407 = vld [vmem:[%s390 + $0x48] sm:$0xff]
        %v408 = vld [vmem:[%s390 + $0x50] sm:$0xff]
        %v409 = vld [vmem:[%s390 + $0x58] sm:$0xff]
        %v410 = vld [vmem:[%s390 + $0x60] sm:$0xff]
        %v411 = vld [vmem:[%s390 + $0x68] sm:$0xff]
        %v412 = vld [vmem:[%s390 + $0x70] sm:$0xff]
        %v413 = vld [vmem:[%s390 + $0x78] sm:$0xff]
        %v414 = vld [vmem:[%s396] sm:$0xff]
        %v415 = vld [vmem:[%s396 + $0x8] sm:$0xff]
        %v416 = vld [vmem:[%s396 + $0x10] sm:$0xff]
        %v417 = vld [vmem:[%s396 + $0x18] sm:$0xff]
        %v418 = vld [vmem:[%s396 + $0x20] sm:$0xff]
        %v419 = vld [vmem:[%s396 + $0x28] sm:$0xff]
        %v420 = vld [vmem:[%s396 + $0x30] sm:$0xff]
        %v421 = vld [vmem:[%s396 + $0x38] sm:$0xff]
        %v422 = vld [vmem:[%s396 + $0x40] sm:$0xff]
        %v423 = vld [vmem:[%s396 + $0x48] sm:$0xff]
        %v424 = vld [vmem:[%s396 + $0x50] sm:$0xff]
        %v425 = vld [vmem:[%s396 + $0x58] sm:$0xff]
        %v426 = vld [vmem:[%s396 + $0x60] sm:$0xff]
        %v427 = vld [vmem:[%s396 + $0x68] sm:$0xff]
        %v428 = vld [vmem:[%s396 + $0x70] sm:$0xff]
        %v429 = vld [vmem:[%s396 + $0x78] sm:$0xff]
        %v430 = vlaneseq
        %v431 = vand.u32 %v430, 127
        %v432 = vadd.s32 %v431, 128
        %433 = vset.pattern.permute.xlu0 0
        %434 = vperm.xlu0 %433, %v398
        %v435 = vpop.permute.xlu0 %434
        %436 = vset.pattern.permute.xlu0 0
        %437 = vperm.xlu0 %436, %v399
        %v438 = vpop.permute.xlu0 %437
        %439 = vset.pattern.permute.xlu0 0
        %440 = vperm.xlu0 %439, %v400
        %v441 = vpop.permute.xlu0 %440
        %442 = vset.pattern.permute.xlu0 0
        %443 = vperm.xlu0 %442, %v401
        %v444 = vpop.permute.xlu0 %443
        %445 = vset.pattern.permute.xlu0 0
        %446 = vperm.xlu0 %445, %v402
        %v447 = vpop.permute.xlu0 %446
        %448 = vset.pattern.permute.xlu0 0
        %449 = vperm.xlu0 %448, %v403
        %v450 = vpop.permute.xlu0 %449
        %451 = vset.pattern.permute.xlu0 0
        %452 = vperm.xlu0 %451, %v404
        %v453 = vpop.permute.xlu0 %452
        %454 = vset.pattern.permute.xlu0 0
        %455 = vperm.xlu0 %454, %v405
        %v456 = vpop.permute.xlu0 %455
        %457 = vset.pattern.permute.xlu0 0
        %458 = vperm.xlu0 %457, %v406
        %v459 = vpop.permute.xlu0 %458
        %460 = vset.pattern.permute.xlu0 0
        %461 = vperm.xlu0 %460, %v407
        %v462 = vpop.permute.xlu0 %461
        %463 = vset.pattern.permute.xlu0 0
        %464 = vperm.xlu0 %463, %v408
        %v465 = vpop.permute.xlu0 %464
        %466 = vset.pattern.permute.xlu0 0
        %467 = vperm.xlu0 %466, %v409
        %v468 = vpop.permute.xlu0 %467
        %469 = vset.pattern.permute.xlu0 0
        %470 = vperm.xlu0 %469, %v410
        %v471 = vpop.permute.xlu0 %470
        %472 = vset.pattern.permute.xlu0 0
        %473 = vperm.xlu0 %472, %v411
        %v474 = vpop.permute.xlu0 %473
        %475 = vset.pattern.permute.xlu0 0
        %476 = vperm.xlu0 %475, %v412
        %v477 = vpop.permute.xlu0 %476
        %478 = vset.pattern.permute.xlu0 0
        %479 = vperm.xlu0 %478, %v413
        %v480 = vpop.permute.xlu0 %479
        %vm481 = vcmp.eq.s32.totalorder %v431, %v435
        %vm482 = vcmp.eq.s32.totalorder %v432, %v435
        %vm483 = vcmp.eq.s32.totalorder %v431, %v438
        %vm484 = vcmp.eq.s32.totalorder %v432, %v438
        %vm485 = vcmp.eq.s32.totalorder %v431, %v441
        %vm486 = vcmp.eq.s32.totalorder %v432, %v441
        %vm487 = vcmp.eq.s32.totalorder %v431, %v444
        %vm488 = vcmp.eq.s32.totalorder %v432, %v444
        %vm489 = vcmp.eq.s32.totalorder %v431, %v447
        %vm490 = vcmp.eq.s32.totalorder %v432, %v447
        %vm491 = vcmp.eq.s32.totalorder %v431, %v450
        %vm492 = vcmp.eq.s32.totalorder %v432, %v450
        %vm493 = vcmp.eq.s32.totalorder %v431, %v453
        %vm494 = vcmp.eq.s32.totalorder %v432, %v453
        %vm495 = vcmp.eq.s32.totalorder %v431, %v456
        %vm496 = vcmp.eq.s32.totalorder %v432, %v456
        %vm497 = vcmp.eq.s32.totalorder %v431, %v459
        %vm498 = vcmp.eq.s32.totalorder %v432, %v459
        %vm499 = vcmp.eq.s32.totalorder %v431, %v462
        %vm500 = vcmp.eq.s32.totalorder %v432, %v462
        %vm501 = vcmp.eq.s32.totalorder %v431, %v465
        %vm502 = vcmp.eq.s32.totalorder %v432, %v465
        %vm503 = vcmp.eq.s32.totalorder %v431, %v468
        %vm504 = vcmp.eq.s32.totalorder %v432, %v468
        %vm505 = vcmp.eq.s32.totalorder %v431, %v471
        %vm506 = vcmp.eq.s32.totalorder %v432, %v471
        %vm507 = vcmp.eq.s32.totalorder %v431, %v474
        %vm508 = vcmp.eq.s32.totalorder %v432, %v474
        %vm509 = vcmp.eq.s32.totalorder %v431, %v477
        %vm510 = vcmp.eq.s32.totalorder %v432, %v477
        %vm511 = vcmp.eq.s32.totalorder %v431, %v480
        %vm512 = vcmp.eq.s32.totalorder %v432, %v480
        %v513 = vsel %vm481, 1.0, 0.0
        %v514 = vsel %vm482, 1.0, 0.0
        %v515 = vsel %vm483, 1.0, 0.0
        %v516 = vsel %vm484, 1.0, 0.0
        %v517 = vsel %vm485, 1.0, 0.0
        %v518 = vsel %vm486, 1.0, 0.0
        %v519 = vsel %vm487, 1.0, 0.0
        %v520 = vsel %vm488, 1.0, 0.0
        %v521 = vsel %vm489, 1.0, 0.0
        %v522 = vsel %vm490, 1.0, 0.0
        %v523 = vsel %vm491, 1.0, 0.0
        %v524 = vsel %vm492, 1.0, 0.0
        %v525 = vsel %vm493, 1.0, 0.0
        %v526 = vsel %vm494, 1.0, 0.0
        %v527 = vsel %vm495, 1.0, 0.0
        %v528 = vsel %vm496, 1.0, 0.0
        %v529 = vsel %vm497, 1.0, 0.0
        %v530 = vsel %vm498, 1.0, 0.0
        %v531 = vsel %vm499, 1.0, 0.0
        %v532 = vsel %vm500, 1.0, 0.0
        %v533 = vsel %vm501, 1.0, 0.0
        %v534 = vsel %vm502, 1.0, 0.0
        %v535 = vsel %vm503, 1.0, 0.0
        %v536 = vsel %vm504, 1.0, 0.0
        %v537 = vsel %vm505, 1.0, 0.0
        %v538 = vsel %vm506, 1.0, 0.0
        %v539 = vsel %vm507, 1.0, 0.0
        %v540 = vsel %vm508, 1.0, 0.0
        %v541 = vsel %vm509, 1.0, 0.0
        %v542 = vsel %vm510, 1.0, 0.0
        %v543 = vsel %vm511, 1.0, 0.0
        %v544 = vsel %vm512, 1.0, 0.0
        %545 = vset.pattern.permute.xlu0 1
        %546 = vperm.xlu0 %545, %v398
        %v547 = vpop.permute.xlu0 %546
        %548 = vset.pattern.permute.xlu0 1
        %549 = vperm.xlu0 %548, %v399
        %v550 = vpop.permute.xlu0 %549
        %551 = vset.pattern.permute.xlu0 1
        %552 = vperm.xlu0 %551, %v400
        %v553 = vpop.permute.xlu0 %552
        %554 = vset.pattern.permute.xlu0 1
        %555 = vperm.xlu0 %554, %v401
        %v556 = vpop.permute.xlu0 %555
        %557 = vset.pattern.permute.xlu0 1
        %558 = vperm.xlu0 %557, %v402
        %v559 = vpop.permute.xlu0 %558
        %560 = vset.pattern.permute.xlu0 1
        %561 = vperm.xlu0 %560, %v403
        %v562 = vpop.permute.xlu0 %561
        %563 = vset.pattern.permute.xlu0 1
        %564 = vperm.xlu0 %563, %v404
        %v565 = vpop.permute.xlu0 %564
        %566 = vset.pattern.permute.xlu0 1
        %567 = vperm.xlu0 %566, %v405
        %v568 = vpop.permute.xlu0 %567
        %569 = vset.pattern.permute.xlu0 1
        %570 = vperm.xlu0 %569, %v406
        %v571 = vpop.permute.xlu0 %570
        %572 = vset.pattern.permute.xlu0 1
        %573 = vperm.xlu0 %572, %v407
        %v574 = vpop.permute.xlu0 %573
        %575 = vset.pattern.permute.xlu0 1
        %576 = vperm.xlu0 %575, %v408
        %v577 = vpop.permute.xlu0 %576
        %578 = vset.pattern.permute.xlu0 1
        %579 = vperm.xlu0 %578, %v409
        %v580 = vpop.permute.xlu0 %579
        %581 = vset.pattern.permute.xlu0 1
        %582 = vperm.xlu0 %581, %v410
        %v583 = vpop.permute.xlu0 %582
        %584 = vset.pattern.permute.xlu0 1
        %585 = vperm.xlu0 %584, %v411
        %v586 = vpop.permute.xlu0 %585
        %587 = vset.pattern.permute.xlu0 1
        %588 = vperm.xlu0 %587, %v412
        %v589 = vpop.permute.xlu0 %588
        %590 = vset.pattern.permute.xlu0 1
        %591 = vperm.xlu0 %590, %v413
        %v592 = vpop.permute.xlu0 %591
        %vm593 = vcmp.eq.s32.totalorder %v431, %v547
        %vm594 = vcmp.eq.s32.totalorder %v432, %v547
        %vm595 = vcmp.eq.s32.totalorder %v431, %v550
        %vm596 = vcmp.eq.s32.totalorder %v432, %v550
        %vm597 = vcmp.eq.s32.totalorder %v431, %v553
        %vm598 = vcmp.eq.s32.totalorder %v432, %v553
        %vm599 = vcmp.eq.s32.totalorder %v431, %v556
        %vm600 = vcmp.eq.s32.totalorder %v432, %v556
        %vm601 = vcmp.eq.s32.totalorder %v431, %v559
        %vm602 = vcmp.eq.s32.totalorder %v432, %v559
        %vm603 = vcmp.eq.s32.totalorder %v431, %v562
        %vm604 = vcmp.eq.s32.totalorder %v432, %v562
        %vm605 = vcmp.eq.s32.totalorder %v431, %v565
        %vm606 = vcmp.eq.s32.totalorder %v432, %v565
        %vm607 = vcmp.eq.s32.totalorder %v431, %v568
        %vm608 = vcmp.eq.s32.totalorder %v432, %v568
        %vm609 = vcmp.eq.s32.totalorder %v431, %v571
        %vm610 = vcmp.eq.s32.totalorder %v432, %v571
        %vm611 = vcmp.eq.s32.totalorder %v431, %v574
        %vm612 = vcmp.eq.s32.totalorder %v432, %v574
        %vm613 = vcmp.eq.s32.totalorder %v431, %v577
        %vm614 = vcmp.eq.s32.totalorder %v432, %v577
        %vm615 = vcmp.eq.s32.totalorder %v431, %v580
        %vm616 = vcmp.eq.s32.totalorder %v432, %v580
        %vm617 = vcmp.eq.s32.totalorder %v431, %v583
        %vm618 = vcmp.eq.s32.totalorder %v432, %v583
        %vm619 = vcmp.eq.s32.totalorder %v431, %v586
        %vm620 = vcmp.eq.s32.totalorder %v432, %v586
        %vm621 = vcmp.eq.s32.totalorder %v431, %v589
        %vm622 = vcmp.eq.s32.totalorder %v432, %v589
        %vm623 = vcmp.eq.s32.totalorder %v431, %v592
        %vm624 = vcmp.eq.s32.totalorder %v432, %v592
        %v625 = vsel %vm593, 1.0, %v513
        %v626 = vsel %vm594, 1.0, %v514
        %v627 = vsel %vm595, 1.0, %v515
        %v628 = vsel %vm596, 1.0, %v516
        %v629 = vsel %vm597, 1.0, %v517
        %v630 = vsel %vm598, 1.0, %v518
        %v631 = vsel %vm599, 1.0, %v519
        %v632 = vsel %vm600, 1.0, %v520
        %v633 = vsel %vm601, 1.0, %v521
        %v634 = vsel %vm602, 1.0, %v522
        %v635 = vsel %vm603, 1.0, %v523
        %v636 = vsel %vm604, 1.0, %v524
        %v637 = vsel %vm605, 1.0, %v525
        %v638 = vsel %vm606, 1.0, %v526
        %v639 = vsel %vm607, 1.0, %v527
        %v640 = vsel %vm608, 1.0, %v528
        %v641 = vsel %vm609, 1.0, %v529
        %v642 = vsel %vm610, 1.0, %v530
        %v643 = vsel %vm611, 1.0, %v531
        %v644 = vsel %vm612, 1.0, %v532
        %v645 = vsel %vm613, 1.0, %v533
        %v646 = vsel %vm614, 1.0, %v534
        %v647 = vsel %vm615, 1.0, %v535
        %v648 = vsel %vm616, 1.0, %v536
        %v649 = vsel %vm617, 1.0, %v537
        %v650 = vsel %vm618, 1.0, %v538
        %v651 = vsel %vm619, 1.0, %v539
        %v652 = vsel %vm620, 1.0, %v540
        %v653 = vsel %vm621, 1.0, %v541
        %v654 = vsel %vm622, 1.0, %v542
        %v655 = vsel %vm623, 1.0, %v543
        %v656 = vsel %vm624, 1.0, %v544
        %657 = vset.pattern.permute.xlu0 2
        %658 = vperm.xlu0 %657, %v398
        %v659 = vpop.permute.xlu0 %658
        %660 = vset.pattern.permute.xlu0 2
        %661 = vperm.xlu0 %660, %v399
        %v662 = vpop.permute.xlu0 %661
        %663 = vset.pattern.permute.xlu0 2
        %664 = vperm.xlu0 %663, %v400
        %v665 = vpop.permute.xlu0 %664
        %666 = vset.pattern.permute.xlu0 2
        %667 = vperm.xlu0 %666, %v401
        %v668 = vpop.permute.xlu0 %667
        %669 = vset.pattern.permute.xlu0 2
        %670 = vperm.xlu0 %669, %v402
        %v671 = vpop.permute.xlu0 %670
        %672 = vset.pattern.permute.xlu0 2
        %673 = vperm.xlu0 %672, %v403
        %v674 = vpop.permute.xlu0 %673
        %675 = vset.pattern.permute.xlu0 2
        %676 = vperm.xlu0 %675, %v404
        %v677 = vpop.permute.xlu0 %676
        %678 = vset.pattern.permute.xlu0 2
        %679 = vperm.xlu0 %678, %v405
        %v680 = vpop.permute.xlu0 %679
        %681 = vset.pattern.permute.xlu0 2
        %682 = vperm.xlu0 %681, %v406
        %v683 = vpop.permute.xlu0 %682
        %684 = vset.pattern.permute.xlu0 2
        %685 = vperm.xlu0 %684, %v407
        %v686 = vpop.permute.xlu0 %685
        %687 = vset.pattern.permute.xlu0 2
        %688 = vperm.xlu0 %687, %v408
        %v689 = vpop.permute.xlu0 %688
        %690 = vset.pattern.permute.xlu0 2
        %691 = vperm.xlu0 %690, %v409
        %v692 = vpop.permute.xlu0 %691
        %693 = vset.pattern.permute.xlu0 2
        %694 = vperm.xlu0 %693, %v410
        %v695 = vpop.permute.xlu0 %694
        %696 = vset.pattern.permute.xlu0 2
        %697 = vperm.xlu0 %696, %v411
        %v698 = vpop.permute.xlu0 %697
        %699 = vset.pattern.permute.xlu0 2
        %700 = vperm.xlu0 %699, %v412
        %v701 = vpop.permute.xlu0 %700
        %702 = vset.pattern.permute.xlu0 2
        %703 = vperm.xlu0 %702, %v413
        %v704 = vpop.permute.xlu0 %703
        %vm705 = vcmp.eq.s32.totalorder %v431, %v659
        %vm706 = vcmp.eq.s32.totalorder %v432, %v659
        %vm707 = vcmp.eq.s32.totalorder %v431, %v662
        %vm708 = vcmp.eq.s32.totalorder %v432, %v662
        %vm709 = vcmp.eq.s32.totalorder %v431, %v665
        %vm710 = vcmp.eq.s32.totalorder %v432, %v665
        %vm711 = vcmp.eq.s32.totalorder %v431, %v668
        %vm712 = vcmp.eq.s32.totalorder %v432, %v668
        %vm713 = vcmp.eq.s32.totalorder %v431, %v671
        %vm714 = vcmp.eq.s32.totalorder %v432, %v671
        %vm715 = vcmp.eq.s32.totalorder %v431, %v674
        %vm716 = vcmp.eq.s32.totalorder %v432, %v674
        %vm717 = vcmp.eq.s32.totalorder %v431, %v677
        %vm718 = vcmp.eq.s32.totalorder %v432, %v677
        %vm719 = vcmp.eq.s32.totalorder %v431, %v680
        %vm720 = vcmp.eq.s32.totalorder %v432, %v680
        %vm721 = vcmp.eq.s32.totalorder %v431, %v683
        %vm722 = vcmp.eq.s32.totalorder %v432, %v683
        %vm723 = vcmp.eq.s32.totalorder %v431, %v686
        %vm724 = vcmp.eq.s32.totalorder %v432, %v686
        %vm725 = vcmp.eq.s32.totalorder %v431, %v689
        %vm726 = vcmp.eq.s32.totalorder %v432, %v689
        %vm727 = vcmp.eq.s32.totalorder %v431, %v692
        %vm728 = vcmp.eq.s32.totalorder %v432, %v692
        %vm729 = vcmp.eq.s32.totalorder %v431, %v695
        %vm730 = vcmp.eq.s32.totalorder %v432, %v695
        %vm731 = vcmp.eq.s32.totalorder %v431, %v698
        %vm732 = vcmp.eq.s32.totalorder %v432, %v698
        %vm733 = vcmp.eq.s32.totalorder %v431, %v701
        %vm734 = vcmp.eq.s32.totalorder %v432, %v701
        %vm735 = vcmp.eq.s32.totalorder %v431, %v704
        %vm736 = vcmp.eq.s32.totalorder %v432, %v704
        %v737 = vsel %vm705, 1.0, %v625
        %v738 = vsel %vm706, 1.0, %v626
        %v739 = vsel %vm707, 1.0, %v627
        %v740 = vsel %vm708, 1.0, %v628
        %v741 = vsel %vm709, 1.0, %v629
        %v742 = vsel %vm710, 1.0, %v630
        %v743 = vsel %vm711, 1.0, %v631
        %v744 = vsel %vm712, 1.0, %v632
        %v745 = vsel %vm713, 1.0, %v633
        %v746 = vsel %vm714, 1.0, %v634
        %v747 = vsel %vm715, 1.0, %v635
        %v748 = vsel %vm716, 1.0, %v636
        %v749 = vsel %vm717, 1.0, %v637
        %v750 = vsel %vm718, 1.0, %v638
        %v751 = vsel %vm719, 1.0, %v639
        %v752 = vsel %vm720, 1.0, %v640
        %v753 = vsel %vm721, 1.0, %v641
        %v754 = vsel %vm722, 1.0, %v642
        %v755 = vsel %vm723, 1.0, %v643
        %v756 = vsel %vm724, 1.0, %v644
        %v757 = vsel %vm725, 1.0, %v645
        %v758 = vsel %vm726, 1.0, %v646
        %v759 = vsel %vm727, 1.0, %v647
        %v760 = vsel %vm728, 1.0, %v648
        %v761 = vsel %vm729, 1.0, %v649
        %v762 = vsel %vm730, 1.0, %v650
        %v763 = vsel %vm731, 1.0, %v651
        %v764 = vsel %vm732, 1.0, %v652
        %v765 = vsel %vm733, 1.0, %v653
        %v766 = vsel %vm734, 1.0, %v654
        %v767 = vsel %vm735, 1.0, %v655
        %v768 = vsel %vm736, 1.0, %v656
        %769 = vset.pattern.permute.xlu0 3
        %770 = vperm.xlu0 %769, %v398
        %v771 = vpop.permute.xlu0 %770
        %772 = vset.pattern.permute.xlu0 3
        %773 = vperm.xlu0 %772, %v399
        %v774 = vpop.permute.xlu0 %773
        %775 = vset.pattern.permute.xlu0 3
        %776 = vperm.xlu0 %775, %v400
        %v777 = vpop.permute.xlu0 %776
        %778 = vset.pattern.permute.xlu0 3
        %779 = vperm.xlu0 %778, %v401
        %v780 = vpop.permute.xlu0 %779
        %781 = vset.pattern.permute.xlu0 3
        %782 = vperm.xlu0 %781, %v402
        %v783 = vpop.permute.xlu0 %782
        %784 = vset.pattern.permute.xlu0 3
        %785 = vperm.xlu0 %784, %v403
        %v786 = vpop.permute.xlu0 %785
        %787 = vset.pattern.permute.xlu0 3
        %788 = vperm.xlu0 %787, %v404
        %v789 = vpop.permute.xlu0 %788
        %790 = vset.pattern.permute.xlu0 3
        %791 = vperm.xlu0 %790, %v405
        %v792 = vpop.permute.xlu0 %791
        %793 = vset.pattern.permute.xlu0 3
        %794 = vperm.xlu0 %793, %v406
        %v795 = vpop.permute.xlu0 %794
        %796 = vset.pattern.permute.xlu0 3
        %797 = vperm.xlu0 %796, %v407
        %v798 = vpop.permute.xlu0 %797
        %799 = vset.pattern.permute.xlu0 3
        %800 = vperm.xlu0 %799, %v408
        %v801 = vpop.permute.xlu0 %800
        %802 = vset.pattern.permute.xlu0 3
        %803 = vperm.xlu0 %802, %v409
        %v804 = vpop.permute.xlu0 %803
        %805 = vset.pattern.permute.xlu0 3
        %806 = vperm.xlu0 %805, %v410
        %v807 = vpop.permute.xlu0 %806
        %808 = vset.pattern.permute.xlu0 3
        %809 = vperm.xlu0 %808, %v411
        %v810 = vpop.permute.xlu0 %809
        %811 = vset.pattern.permute.xlu0 3
        %812 = vperm.xlu0 %811, %v412
        %v813 = vpop.permute.xlu0 %812
        %814 = vset.pattern.permute.xlu0 3
        %815 = vperm.xlu0 %814, %v413
        %v816 = vpop.permute.xlu0 %815
        %vm817 = vcmp.eq.s32.totalorder %v431, %v771
        %vm818 = vcmp.eq.s32.totalorder %v432, %v771
        %vm819 = vcmp.eq.s32.totalorder %v431, %v774
        %vm820 = vcmp.eq.s32.totalorder %v432, %v774
        %vm821 = vcmp.eq.s32.totalorder %v431, %v777
        %vm822 = vcmp.eq.s32.totalorder %v432, %v777
        %vm823 = vcmp.eq.s32.totalorder %v431, %v780
        %vm824 = vcmp.eq.s32.totalorder %v432, %v780
        %vm825 = vcmp.eq.s32.totalorder %v431, %v783
        %vm826 = vcmp.eq.s32.totalorder %v432, %v783
        %vm827 = vcmp.eq.s32.totalorder %v431, %v786
        %vm828 = vcmp.eq.s32.totalorder %v432, %v786
        %vm829 = vcmp.eq.s32.totalorder %v431, %v789
        %vm830 = vcmp.eq.s32.totalorder %v432, %v789
        %vm831 = vcmp.eq.s32.totalorder %v431, %v792
        %vm832 = vcmp.eq.s32.totalorder %v432, %v792
        %vm833 = vcmp.eq.s32.totalorder %v431, %v795
        %vm834 = vcmp.eq.s32.totalorder %v432, %v795
        %vm835 = vcmp.eq.s32.totalorder %v431, %v798
        %vm836 = vcmp.eq.s32.totalorder %v432, %v798
        %vm837 = vcmp.eq.s32.totalorder %v431, %v801
        %vm838 = vcmp.eq.s32.totalorder %v432, %v801
        %vm839 = vcmp.eq.s32.totalorder %v431, %v804
        %vm840 = vcmp.eq.s32.totalorder %v432, %v804
        %vm841 = vcmp.eq.s32.totalorder %v431, %v807
        %vm842 = vcmp.eq.s32.totalorder %v432, %v807
        %vm843 = vcmp.eq.s32.totalorder %v431, %v810
        %vm844 = vcmp.eq.s32.totalorder %v432, %v810
        %vm845 = vcmp.eq.s32.totalorder %v431, %v813
        %vm846 = vcmp.eq.s32.totalorder %v432, %v813
        %vm847 = vcmp.eq.s32.totalorder %v431, %v816
        %vm848 = vcmp.eq.s32.totalorder %v432, %v816
        %v849 = vsel %vm817, 1.0, %v737
        %v850 = vsel %vm818, 1.0, %v738
        %v851 = vsel %vm819, 1.0, %v739
        %v852 = vsel %vm820, 1.0, %v740
        %v853 = vsel %vm821, 1.0, %v741
        %v854 = vsel %vm822, 1.0, %v742
        %v855 = vsel %vm823, 1.0, %v743
        %v856 = vsel %vm824, 1.0, %v744
        %v857 = vsel %vm825, 1.0, %v745
        %v858 = vsel %vm826, 1.0, %v746
        %v859 = vsel %vm827, 1.0, %v747
        %v860 = vsel %vm828, 1.0, %v748
        %v861 = vsel %vm829, 1.0, %v749
        %v862 = vsel %vm830, 1.0, %v750
        %v863 = vsel %vm831, 1.0, %v751
        %v864 = vsel %vm832, 1.0, %v752
        %v865 = vsel %vm833, 1.0, %v753
        %v866 = vsel %vm834, 1.0, %v754
        %v867 = vsel %vm835, 1.0, %v755
        %v868 = vsel %vm836, 1.0, %v756
        %v869 = vsel %vm837, 1.0, %v757
        %v870 = vsel %vm838, 1.0, %v758
        %v871 = vsel %vm839, 1.0, %v759
        %v872 = vsel %vm840, 1.0, %v760
        %v873 = vsel %vm841, 1.0, %v761
        %v874 = vsel %vm842, 1.0, %v762
        %v875 = vsel %vm843, 1.0, %v763
        %v876 = vsel %vm844, 1.0, %v764
        %v877 = vsel %vm845, 1.0, %v765
        %v878 = vsel %vm846, 1.0, %v766
        %v879 = vsel %vm847, 1.0, %v767
        %v880 = vsel %vm848, 1.0, %v768
        %881 = vset.pattern.permute.xlu0 4
        %882 = vperm.xlu0 %881, %v398
        %v883 = vpop.permute.xlu0 %882
        %884 = vset.pattern.permute.xlu0 4
        %885 = vperm.xlu0 %884, %v399
        %v886 = vpop.permute.xlu0 %885
        %887 = vset.pattern.permute.xlu0 4
        %888 = vperm.xlu0 %887, %v400
        %v889 = vpop.permute.xlu0 %888
        %890 = vset.pattern.permute.xlu0 4
        %891 = vperm.xlu0 %890, %v401
        %v892 = vpop.permute.xlu0 %891
        %893 = vset.pattern.permute.xlu0 4
        %894 = vperm.xlu0 %893, %v402
        %v895 = vpop.permute.xlu0 %894
        %896 = vset.pattern.permute.xlu0 4
        %897 = vperm.xlu0 %896, %v403
        %v898 = vpop.permute.xlu0 %897
        %899 = vset.pattern.permute.xlu0 4
        %900 = vperm.xlu0 %899, %v404
        %v901 = vpop.permute.xlu0 %900
        %902 = vset.pattern.permute.xlu0 4
        %903 = vperm.xlu0 %902, %v405
        %v904 = vpop.permute.xlu0 %903
        %905 = vset.pattern.permute.xlu0 4
        %906 = vperm.xlu0 %905, %v406
        %v907 = vpop.permute.xlu0 %906
        %908 = vset.pattern.permute.xlu0 4
        %909 = vperm.xlu0 %908, %v407
        %v910 = vpop.permute.xlu0 %909
        %911 = vset.pattern.permute.xlu0 4
        %912 = vperm.xlu0 %911, %v408
        %v913 = vpop.permute.xlu0 %912
        %914 = vset.pattern.permute.xlu0 4
        %915 = vperm.xlu0 %914, %v409
        %v916 = vpop.permute.xlu0 %915
        %917 = vset.pattern.permute.xlu0 4
        %918 = vperm.xlu0 %917, %v410
        %v919 = vpop.permute.xlu0 %918
        %920 = vset.pattern.permute.xlu0 4
        %921 = vperm.xlu0 %920, %v411
        %v922 = vpop.permute.xlu0 %921
        %923 = vset.pattern.permute.xlu0 4
        %924 = vperm.xlu0 %923, %v412
        %v925 = vpop.permute.xlu0 %924
        %926 = vset.pattern.permute.xlu0 4
        %927 = vperm.xlu0 %926, %v413
        %v928 = vpop.permute.xlu0 %927
        %vm929 = vcmp.eq.s32.totalorder %v431, %v883
        %vm930 = vcmp.eq.s32.totalorder %v432, %v883
        %vm931 = vcmp.eq.s32.totalorder %v431, %v886
        %vm932 = vcmp.eq.s32.totalorder %v432, %v886
        %vm933 = vcmp.eq.s32.totalorder %v431, %v889
        %vm934 = vcmp.eq.s32.totalorder %v432, %v889
        %vm935 = vcmp.eq.s32.totalorder %v431, %v892
        %vm936 = vcmp.eq.s32.totalorder %v432, %v892
        %vm937 = vcmp.eq.s32.totalorder %v431, %v895
        %vm938 = vcmp.eq.s32.totalorder %v432, %v895
        %vm939 = vcmp.eq.s32.totalorder %v431, %v898
        %vm940 = vcmp.eq.s32.totalorder %v432, %v898
        %vm941 = vcmp.eq.s32.totalorder %v431, %v901
        %vm942 = vcmp.eq.s32.totalorder %v432, %v901
        %vm943 = vcmp.eq.s32.totalorder %v431, %v904
        %vm944 = vcmp.eq.s32.totalorder %v432, %v904
        %vm945 = vcmp.eq.s32.totalorder %v431, %v907
        %vm946 = vcmp.eq.s32.totalorder %v432, %v907
        %vm947 = vcmp.eq.s32.totalorder %v431, %v910
        %vm948 = vcmp.eq.s32.totalorder %v432, %v910
        %vm949 = vcmp.eq.s32.totalorder %v431, %v913
        %vm950 = vcmp.eq.s32.totalorder %v432, %v913
        %vm951 = vcmp.eq.s32.totalorder %v431, %v916
        %vm952 = vcmp.eq.s32.totalorder %v432, %v916
        %vm953 = vcmp.eq.s32.totalorder %v431, %v919
        %vm954 = vcmp.eq.s32.totalorder %v432, %v919
        %vm955 = vcmp.eq.s32.totalorder %v431, %v922
        %vm956 = vcmp.eq.s32.totalorder %v432, %v922
        %vm957 = vcmp.eq.s32.totalorder %v431, %v925
        %vm958 = vcmp.eq.s32.totalorder %v432, %v925
        %vm959 = vcmp.eq.s32.totalorder %v431, %v928
        %vm960 = vcmp.eq.s32.totalorder %v432, %v928
        %v961 = vsel %vm929, 1.0, %v849
        %v962 = vsel %vm930, 1.0, %v850
        %v963 = vsel %vm931, 1.0, %v851
        %v964 = vsel %vm932, 1.0, %v852
        %v965 = vsel %vm933, 1.0, %v853
        %v966 = vsel %vm934, 1.0, %v854
        %v967 = vsel %vm935, 1.0, %v855
        %v968 = vsel %vm936, 1.0, %v856
        %v969 = vsel %vm937, 1.0, %v857
        %v970 = vsel %vm938, 1.0, %v858
        %v971 = vsel %vm939, 1.0, %v859
        %v972 = vsel %vm940, 1.0, %v860
        %v973 = vsel %vm941, 1.0, %v861
        %v974 = vsel %vm942, 1.0, %v862
        %v975 = vsel %vm943, 1.0, %v863
        %v976 = vsel %vm944, 1.0, %v864
        %v977 = vsel %vm945, 1.0, %v865
        %v978 = vsel %vm946, 1.0, %v866
        %v979 = vsel %vm947, 1.0, %v867
        %v980 = vsel %vm948, 1.0, %v868
        %v981 = vsel %vm949, 1.0, %v869
        %v982 = vsel %vm950, 1.0, %v870
        %v983 = vsel %vm951, 1.0, %v871
        %v984 = vsel %vm952, 1.0, %v872
        %v985 = vsel %vm953, 1.0, %v873
        %v986 = vsel %vm954, 1.0, %v874
        %v987 = vsel %vm955, 1.0, %v875
        %v988 = vsel %vm956, 1.0, %v876
        %v989 = vsel %vm957, 1.0, %v877
        %v990 = vsel %vm958, 1.0, %v878
        %v991 = vsel %vm959, 1.0, %v879
        %v992 = vsel %vm960, 1.0, %v880
        %993 = vset.pattern.permute.xlu0 5
        %994 = vperm.xlu0 %993, %v398
        %v995 = vpop.permute.xlu0 %994
        %996 = vset.pattern.permute.xlu0 5
        %997 = vperm.xlu0 %996, %v399
        %v998 = vpop.permute.xlu0 %997
        %999 = vset.pattern.permute.xlu0 5
        %1000 = vperm.xlu0 %999, %v400
        %v1001 = vpop.permute.xlu0 %1000
        %1002 = vset.pattern.permute.xlu0 5
        %1003 = vperm.xlu0 %1002, %v401
        %v1004 = vpop.permute.xlu0 %1003
        %1005 = vset.pattern.permute.xlu0 5
        %1006 = vperm.xlu0 %1005, %v402
        %v1007 = vpop.permute.xlu0 %1006
        %1008 = vset.pattern.permute.xlu0 5
        %1009 = vperm.xlu0 %1008, %v403
        %v1010 = vpop.permute.xlu0 %1009
        %1011 = vset.pattern.permute.xlu0 5
        %1012 = vperm.xlu0 %1011, %v404
        %v1013 = vpop.permute.xlu0 %1012
        %1014 = vset.pattern.permute.xlu0 5
        %1015 = vperm.xlu0 %1014, %v405
        %v1016 = vpop.permute.xlu0 %1015
        %1017 = vset.pattern.permute.xlu0 5
        %1018 = vperm.xlu0 %1017, %v406
        %v1019 = vpop.permute.xlu0 %1018
        %1020 = vset.pattern.permute.xlu0 5
        %1021 = vperm.xlu0 %1020, %v407
        %v1022 = vpop.permute.xlu0 %1021
        %1023 = vset.pattern.permute.xlu0 5
        %1024 = vperm.xlu0 %1023, %v408
        %v1025 = vpop.permute.xlu0 %1024
        %1026 = vset.pattern.permute.xlu0 5
        %1027 = vperm.xlu0 %1026, %v409
        %v1028 = vpop.permute.xlu0 %1027
        %1029 = vset.pattern.permute.xlu0 5
        %1030 = vperm.xlu0 %1029, %v410
        %v1031 = vpop.permute.xlu0 %1030
        %1032 = vset.pattern.permute.xlu0 5
        %1033 = vperm.xlu0 %1032, %v411
        %v1034 = vpop.permute.xlu0 %1033
        %1035 = vset.pattern.permute.xlu0 5
        %1036 = vperm.xlu0 %1035, %v412
        %v1037 = vpop.permute.xlu0 %1036
        %1038 = vset.pattern.permute.xlu0 5
        %1039 = vperm.xlu0 %1038, %v413
        %v1040 = vpop.permute.xlu0 %1039
        %vm1041 = vcmp.eq.s32.totalorder %v431, %v995
        %vm1042 = vcmp.eq.s32.totalorder %v432, %v995
        %vm1043 = vcmp.eq.s32.totalorder %v431, %v998
        %vm1044 = vcmp.eq.s32.totalorder %v432, %v998
        %vm1045 = vcmp.eq.s32.totalorder %v431, %v1001
        %vm1046 = vcmp.eq.s32.totalorder %v432, %v1001
        %vm1047 = vcmp.eq.s32.totalorder %v431, %v1004
        %vm1048 = vcmp.eq.s32.totalorder %v432, %v1004
        %vm1049 = vcmp.eq.s32.totalorder %v431, %v1007
        %vm1050 = vcmp.eq.s32.totalorder %v432, %v1007
        %vm1051 = vcmp.eq.s32.totalorder %v431, %v1010
        %vm1052 = vcmp.eq.s32.totalorder %v432, %v1010
        %vm1053 = vcmp.eq.s32.totalorder %v431, %v1013
        %vm1054 = vcmp.eq.s32.totalorder %v432, %v1013
        %vm1055 = vcmp.eq.s32.totalorder %v431, %v1016
        %vm1056 = vcmp.eq.s32.totalorder %v432, %v1016
        %vm1057 = vcmp.eq.s32.totalorder %v431, %v1019
        %vm1058 = vcmp.eq.s32.totalorder %v432, %v1019
        %vm1059 = vcmp.eq.s32.totalorder %v431, %v1022
        %vm1060 = vcmp.eq.s32.totalorder %v432, %v1022
        %vm1061 = vcmp.eq.s32.totalorder %v431, %v1025
        %vm1062 = vcmp.eq.s32.totalorder %v432, %v1025
        %vm1063 = vcmp.eq.s32.totalorder %v431, %v1028
        %vm1064 = vcmp.eq.s32.totalorder %v432, %v1028
        %vm1065 = vcmp.eq.s32.totalorder %v431, %v1031
        %vm1066 = vcmp.eq.s32.totalorder %v432, %v1031
        %vm1067 = vcmp.eq.s32.totalorder %v431, %v1034
        %vm1068 = vcmp.eq.s32.totalorder %v432, %v1034
        %vm1069 = vcmp.eq.s32.totalorder %v431, %v1037
        %vm1070 = vcmp.eq.s32.totalorder %v432, %v1037
        %vm1071 = vcmp.eq.s32.totalorder %v431, %v1040
        %vm1072 = vcmp.eq.s32.totalorder %v432, %v1040
        %v1073 = vsel %vm1041, 1.0, %v961
        %v1074 = vsel %vm1042, 1.0, %v962
        %v1075 = vsel %vm1043, 1.0, %v963
        %v1076 = vsel %vm1044, 1.0, %v964
        %v1077 = vsel %vm1045, 1.0, %v965
        %v1078 = vsel %vm1046, 1.0, %v966
        %v1079 = vsel %vm1047, 1.0, %v967
        %v1080 = vsel %vm1048, 1.0, %v968
        %v1081 = vsel %vm1049, 1.0, %v969
        %v1082 = vsel %vm1050, 1.0, %v970
        %v1083 = vsel %vm1051, 1.0, %v971
        %v1084 = vsel %vm1052, 1.0, %v972
        %v1085 = vsel %vm1053, 1.0, %v973
        %v1086 = vsel %vm1054, 1.0, %v974
        %v1087 = vsel %vm1055, 1.0, %v975
        %v1088 = vsel %vm1056, 1.0, %v976
        %v1089 = vsel %vm1057, 1.0, %v977
        %v1090 = vsel %vm1058, 1.0, %v978
        %v1091 = vsel %vm1059, 1.0, %v979
        %v1092 = vsel %vm1060, 1.0, %v980
        %v1093 = vsel %vm1061, 1.0, %v981
        %v1094 = vsel %vm1062, 1.0, %v982
        %v1095 = vsel %vm1063, 1.0, %v983
        %v1096 = vsel %vm1064, 1.0, %v984
        %v1097 = vsel %vm1065, 1.0, %v985
        %v1098 = vsel %vm1066, 1.0, %v986
        %v1099 = vsel %vm1067, 1.0, %v987
        %v1100 = vsel %vm1068, 1.0, %v988
        %v1101 = vsel %vm1069, 1.0, %v989
        %v1102 = vsel %vm1070, 1.0, %v990
        %v1103 = vsel %vm1071, 1.0, %v991
        %v1104 = vsel %vm1072, 1.0, %v992
        %v1105 = vld [vmem:[%s2] sm:$0xff]
        %v1106 = vld [vmem:[%s2 + $0x8] sm:$0xff]
        %v1107 = vld [vmem:[%s2 + $0x10] sm:$0xff]
        %v1108 = vld [vmem:[%s2 + $0x18] sm:$0xff]
        %v1109 = vld [vmem:[%s2 + $0x20] sm:$0xff]
        %v1110 = vld [vmem:[%s2 + $0x28] sm:$0xff]
        %v1111 = vld [vmem:[%s2 + $0x30] sm:$0xff]
        %v1112 = vld [vmem:[%s2 + $0x38] sm:$0xff]
        %v1113 = vld [vmem:[%s2 + $0x40] sm:$0xff]
        %v1114 = vld [vmem:[%s2 + $0x48] sm:$0xff]
        %v1115 = vld [vmem:[%s2 + $0x50] sm:$0xff]
        %v1116 = vld [vmem:[%s2 + $0x58] sm:$0xff]
        %v1117 = vld [vmem:[%s2 + $0x60] sm:$0xff]
        %v1118 = vld [vmem:[%s2 + $0x68] sm:$0xff]
        %v1119 = vld [vmem:[%s2 + $0x70] sm:$0xff]
        %v1120 = vld [vmem:[%s2 + $0x78] sm:$0xff]
        %v1121 = vld [vmem:[%s2 + $0x80] sm:$0xff]
        %v1122 = vld [vmem:[%s2 + $0x88] sm:$0xff]
        %v1123 = vld [vmem:[%s2 + $0x90] sm:$0xff]
        %v1124 = vld [vmem:[%s2 + $0x98] sm:$0xff]
        %v1125 = vld [vmem:[%s2 + $0xa0] sm:$0xff]
        %v1126 = vld [vmem:[%s2 + $0xa8] sm:$0xff]
        %v1127 = vld [vmem:[%s2 + $0xb0] sm:$0xff]
        %v1128 = vld [vmem:[%s2 + $0xb8] sm:$0xff]
        %v1129 = vld [vmem:[%s2 + $0xc0] sm:$0xff]
        %v1130 = vld [vmem:[%s2 + $0xc8] sm:$0xff]
        %v1131 = vld [vmem:[%s2 + $0xd0] sm:$0xff]
        %v1132 = vld [vmem:[%s2 + $0xd8] sm:$0xff]
        %v1133 = vld [vmem:[%s2 + $0xe0] sm:$0xff]
        %v1134 = vld [vmem:[%s2 + $0xe8] sm:$0xff]
        %v1135 = vld [vmem:[%s2 + $0xf0] sm:$0xff]
        %v1136 = vld [vmem:[%s2 + $0xf8] sm:$0xff]
        %v1137 = vld [vmem:[%s2 + $0x100] sm:$0xff]
        %v1138 = vld [vmem:[%s2 + $0x108] sm:$0xff]
        %v1139 = vld [vmem:[%s2 + $0x110] sm:$0xff]
        %v1140 = vld [vmem:[%s2 + $0x118] sm:$0xff]
        %v1141 = vld [vmem:[%s2 + $0x120] sm:$0xff]
        %v1142 = vld [vmem:[%s2 + $0x128] sm:$0xff]
        %v1143 = vld [vmem:[%s2 + $0x130] sm:$0xff]
        %v1144 = vld [vmem:[%s2 + $0x138] sm:$0xff]
        %v1145 = vld [vmem:[%s2 + $0x140] sm:$0xff]
        %v1146 = vld [vmem:[%s2 + $0x148] sm:$0xff]
        %v1147 = vld [vmem:[%s2 + $0x150] sm:$0xff]
        %v1148 = vld [vmem:[%s2 + $0x158] sm:$0xff]
        %v1149 = vld [vmem:[%s2 + $0x160] sm:$0xff]
        %v1150 = vld [vmem:[%s2 + $0x168] sm:$0xff]
        %v1151 = vld [vmem:[%s2 + $0x170] sm:$0xff]
        %v1152 = vld [vmem:[%s2 + $0x178] sm:$0xff]
        %v1153 = vld [vmem:[%s2 + $0x180] sm:$0xff]
        %v1154 = vld [vmem:[%s2 + $0x188] sm:$0xff]
        %v1155 = vld [vmem:[%s2 + $0x190] sm:$0xff]
        %v1156 = vld [vmem:[%s2 + $0x198] sm:$0xff]
        %v1157 = vld [vmem:[%s2 + $0x1a0] sm:$0xff]
        %v1158 = vld [vmem:[%s2 + $0x1a8] sm:$0xff]
        %v1159 = vld [vmem:[%s2 + $0x1b0] sm:$0xff]
        %v1160 = vld [vmem:[%s2 + $0x1b8] sm:$0xff]
        %v1161 = vld [vmem:[%s2 + $0x1c0] sm:$0xff]
        %v1162 = vld [vmem:[%s2 + $0x1c8] sm:$0xff]
        %v1163 = vld [vmem:[%s2 + $0x1d0] sm:$0xff]
        %v1164 = vld [vmem:[%s2 + $0x1d8] sm:$0xff]
        %v1165 = vld [vmem:[%s2 + $0x1e0] sm:$0xff]
        %v1166 = vld [vmem:[%s2 + $0x1e8] sm:$0xff]
        %v1167 = vld [vmem:[%s2 + $0x1f0] sm:$0xff]
        %v1168 = vld [vmem:[%s2 + $0x1f8] sm:$0xff]
        %v1169 = vld [vmem:[%s3] sm:$0xff]
        %v1170 = vld [vmem:[%s3 + $0x8] sm:$0xff]
        %v1171 = vld [vmem:[%s3 + $0x10] sm:$0xff]
        %v1172 = vld [vmem:[%s3 + $0x18] sm:$0xff]
        %vm1173 = vcmask 130048
        %v1175 = vsel %vm1173, %v414, 0
        %v1178 = vsel %vm1173, %v415, 0
        %v1181 = vsel %vm1173, %v416, 0
        %v1184 = vsel %vm1173, %v417, 0
        %v1187 = vsel %vm1173, %v418, 0
        %v1190 = vsel %vm1173, %v419, 0
        %v1193 = vsel %vm1173, %v420, 0
        %v1196 = vsel %vm1173, %v421, 0
        %v1199 = vsel %vm1173, %v422, 0
        %v1202 = vsel %vm1173, %v423, 0
        %v1205 = vsel %vm1173, %v424, 0
        %v1208 = vsel %vm1173, %v425, 0
        %v1211 = vsel %vm1173, %v426, 0
        %v1214 = vsel %vm1173, %v427, 0
        %v1217 = vsel %vm1173, %v428, 0
        %v1220 = vsel %vm1173, %v429, 0
        %1222 = vmatprep.subr.mxu0 0.0
        %1223 = vmatpush1.msra.mxu0 0.0
        %1224 = vmatprep.subr.mxu0 0.0
        %1225 = vmatpush1.msra.mxu0 0.0
        %1226 = vmatprep.subr.mxu0 0.0
        %1227 = vmatpush1.msra.mxu0 0.0
        %1228 = vmatprep.subr.mxu0 0.0
        %1229 = vmatpush1.msra.mxu0 0.0
        %1230 = vmatprep.subr.mxu0 0.0
        %1231 = vmatpush1.msra.mxu0 0.0
        %1232 = vmatprep.subr.mxu0 0.0
        %1233 = vmatpush1.msra.mxu0 0.0
        %1234 = vmatprep.subr.mxu0 0.0
        %1235 = vmatpush1.msra.mxu0 0.0
        %1236 = vmatprep.subr.mxu0 0.0
        %1237 = vmatpush1.msra.mxu0 0.0
        %1238 = vmatprep.subr.mxu0 0.0
        %1239 = vmatpush1.msra.mxu0 0.0
        %1240 = vmatprep.subr.mxu0 0.0
        %1241 = vmatpush1.msra.mxu0 0.0
        %1242 = vmatprep.subr.mxu0 0.0
        %1243 = vmatpush1.msra.mxu0 0.0
        %1244 = vmatprep.subr.mxu0 0.0
        %1245 = vmatpush1.msra.mxu0 0.0
        %1246 = vmatprep.subr.mxu0 0.0
        %1247 = vmatpush1.msra.mxu0 0.0
        %1248 = vmatprep.subr.mxu0 0.0
        %1249 = vmatpush1.msra.mxu0 0.0
        %1250 = vmatprep.subr.mxu0 %v1172
        %1251 = vmatpush1.msra.mxu0 %v1171
        %1252 = vmatprep.subr.mxu0 %v1170
        %1253 = vmatpush1.msra.mxu0 %v1169
        %1254 = vmatprep.subr.mxu0 0.0
        %1255 = vmatpush2.msra.mxu0 0.0
        %1256 = vmatprep.subr.mxu0 0.0
        %1257 = vmatpush2.msra.mxu0 0.0
        %1258 = vmatprep.subr.mxu0 0.0
        %1259 = vmatpush2.msra.mxu0 0.0
        %1260 = vmatprep.subr.mxu0 0.0
        %1261 = vmatpush2.msra.mxu0 0.0
        %1262 = vmatprep.subr.mxu0 0.0
        %1263 = vmatpush2.msra.mxu0 0.0
        %1264 = vmatprep.subr.mxu0 0.0
        %1265 = vmatpush2.msra.mxu0 0.0
        %1266 = vmatprep.subr.mxu0 0.0
        %1267 = vmatpush2.msra.mxu0 0.0
        %1268 = vmatprep.subr.mxu0 0.0
        %1269 = vmatpush2.msra.mxu0 0.0
        %1270 = vmatprep.subr.mxu0 0.0
        %1271 = vmatpush2.msra.mxu0 0.0
        %1272 = vmatprep.subr.mxu0 0.0
        %1273 = vmatpush2.msra.mxu0 0.0
        %1274 = vmatprep.subr.mxu0 0.0
        %1275 = vmatpush2.msra.mxu0 0.0
        %1276 = vmatprep.subr.mxu0 0.0
        %1277 = vmatpush2.msra.mxu0 0.0
        %1278 = vmatprep.subr.mxu0 0.0
        %1279 = vmatpush2.msra.mxu0 0.0
        %1280 = vmatprep.subr.mxu0 0.0
        %1281 = vmatpush2.msra.mxu0 0.0
        %1282 = vmatprep.subr.mxu0 0.0
        %1283 = vmatpush2.msra.mxu0 0.0
        %1284 = vmatprep.subr.mxu0 0.0
        %1285 = vmatpush2.msra.mxu0 0.0
        %1286 = vmatprep.mubr.f32.mxu0 0.0
        %1287 = vmatmul.mubr.f32.gmra.mxu0 %v1175
        %v1288 = vpop.f32.mrf.mxu0
        %v1289 = vadd.f32 0.0, %v1288
        %v1290 = vpop.f32.mrf.mxu0
        %v1291 = vadd.f32 0.0, %v1290
        %1292 = vmatprep.mubr.f32.mxu0 0.0
        %1293 = vmatmul.mubr.f32.gmra.mxu0 %v1178
        %v1294 = vpop.f32.mrf.mxu0
        %v1295 = vadd.f32 0.0, %v1294
        %v1296 = vpop.f32.mrf.mxu0
        %v1297 = vadd.f32 0.0, %v1296
        %1298 = vmatprep.mubr.f32.mxu0 0.0
        %1299 = vmatmul.mubr.f32.gmra.mxu0 %v1181
        %v1300 = vpop.f32.mrf.mxu0
        %v1301 = vadd.f32 0.0, %v1300
        %v1302 = vpop.f32.mrf.mxu0
        %v1303 = vadd.f32 0.0, %v1302
        %1304 = vmatprep.mubr.f32.mxu0 0.0
        %1305 = vmatmul.mubr.f32.gmra.mxu0 %v1184
        %v1306 = vpop.f32.mrf.mxu0
        %v1307 = vadd.f32 0.0, %v1306
        %v1308 = vpop.f32.mrf.mxu0
        %v1309 = vadd.f32 0.0, %v1308
        %1310 = vmatprep.mubr.f32.mxu0 0.0
        %1311 = vmatmul.mubr.f32.gmra.mxu0 %v1187
        %v1312 = vpop.f32.mrf.mxu0
        %v1313 = vadd.f32 0.0, %v1312
        %v1314 = vpop.f32.mrf.mxu0
        %v1315 = vadd.f32 0.0, %v1314
        %1316 = vmatprep.mubr.f32.mxu0 0.0
        %1317 = vmatmul.mubr.f32.gmra.mxu0 %v1190
        %v1318 = vpop.f32.mrf.mxu0
        %v1319 = vadd.f32 0.0, %v1318
        %v1320 = vpop.f32.mrf.mxu0
        %v1321 = vadd.f32 0.0, %v1320
        %1322 = vmatprep.mubr.f32.mxu0 0.0
        %1323 = vmatmul.mubr.f32.gmra.mxu0 %v1193
        %v1324 = vpop.f32.mrf.mxu0
        %v1325 = vadd.f32 0.0, %v1324
        %v1326 = vpop.f32.mrf.mxu0
        %v1327 = vadd.f32 0.0, %v1326
        %1328 = vmatprep.mubr.f32.mxu0 0.0
        %1329 = vmatmul.mubr.f32.gmra.mxu0 %v1196
        %v1330 = vpop.f32.mrf.mxu0
        %v1331 = vadd.f32 0.0, %v1330
        %v1332 = vpop.f32.mrf.mxu0
        %v1333 = vadd.f32 0.0, %v1332
        %1334 = vmatprep.mubr.f32.mxu0 0.0
        %1335 = vmatmul.mubr.f32.gmra.mxu0 %v1199
        %v1336 = vpop.f32.mrf.mxu0
        %v1337 = vadd.f32 0.0, %v1336
        %v1338 = vpop.f32.mrf.mxu0
        %v1339 = vadd.f32 0.0, %v1338
        %1340 = vmatprep.mubr.f32.mxu0 0.0
        %1341 = vmatmul.mubr.f32.gmra.mxu0 %v1202
        %v1342 = vpop.f32.mrf.mxu0
        %v1343 = vadd.f32 0.0, %v1342
        %v1344 = vpop.f32.mrf.mxu0
        %v1345 = vadd.f32 0.0, %v1344
        %1346 = vmatprep.mubr.f32.mxu0 0.0
        %1347 = vmatmul.mubr.f32.gmra.mxu0 %v1205
        %v1348 = vpop.f32.mrf.mxu0
        %v1349 = vadd.f32 0.0, %v1348
        %v1350 = vpop.f32.mrf.mxu0
        %v1351 = vadd.f32 0.0, %v1350
        %1352 = vmatprep.mubr.f32.mxu0 0.0
        %1353 = vmatmul.mubr.f32.gmra.mxu0 %v1208
        %v1354 = vpop.f32.mrf.mxu0
        %v1355 = vadd.f32 0.0, %v1354
        %v1356 = vpop.f32.mrf.mxu0
        %v1357 = vadd.f32 0.0, %v1356
        %1358 = vmatprep.mubr.f32.mxu0 0.0
        %1359 = vmatmul.mubr.f32.gmra.mxu0 %v1211
        %v1360 = vpop.f32.mrf.mxu0
        %v1361 = vadd.f32 0.0, %v1360
        %v1362 = vpop.f32.mrf.mxu0
        %v1363 = vadd.f32 0.0, %v1362
        %1364 = vmatprep.mubr.f32.mxu0 0.0
        %1365 = vmatmul.mubr.f32.gmra.mxu0 %v1214
        %v1366 = vpop.f32.mrf.mxu0
        %v1367 = vadd.f32 0.0, %v1366
        %v1368 = vpop.f32.mrf.mxu0
        %v1369 = vadd.f32 0.0, %v1368
        %1370 = vmatprep.mubr.f32.mxu0 0.0
        %1371 = vmatmul.mubr.f32.gmra.mxu0 %v1217
        %v1372 = vpop.f32.mrf.mxu0
        %v1373 = vadd.f32 0.0, %v1372
        %v1374 = vpop.f32.mrf.mxu0
        %v1375 = vadd.f32 0.0, %v1374
        %1376 = vmatprep.mubr.f32.mxu0 0.0
        %1377 = vmatmul.mubr.f32.gmra.mxu0 %v1220
        %v1378 = vpop.f32.mrf.mxu0
        %v1379 = vadd.f32 0.0, %v1378
        %v1380 = vpop.f32.mrf.mxu0
        %v1381 = vadd.f32 0.0, %v1380
        %1382 = vdwg.mxu0
        %1383 = vmatprep.subr.mxu0 %v1136
        %1384 = vmatpush1.msra.mxu0 %v1135
        %1385 = vmatprep.subr.mxu0 %v1134
        %1386 = vmatpush1.msra.mxu0 %v1133
        %1387 = vmatprep.subr.mxu0 %v1132
        %1388 = vmatpush1.msra.mxu0 %v1131
        %1389 = vmatprep.subr.mxu0 %v1130
        %1390 = vmatpush1.msra.mxu0 %v1129
        %1391 = vmatprep.subr.mxu0 %v1128
        %1392 = vmatpush1.msra.mxu0 %v1127
        %1393 = vmatprep.subr.mxu0 %v1126
        %1394 = vmatpush1.msra.mxu0 %v1125
        %1395 = vmatprep.subr.mxu0 %v1124
        %1396 = vmatpush1.msra.mxu0 %v1123
        %1397 = vmatprep.subr.mxu0 %v1122
        %1398 = vmatpush1.msra.mxu0 %v1121
        %1399 = vmatprep.subr.mxu0 %v1120
        %1400 = vmatpush1.msra.mxu0 %v1119
        %1401 = vmatprep.subr.mxu0 %v1118
        %1402 = vmatpush1.msra.mxu0 %v1117
        %1403 = vmatprep.subr.mxu0 %v1116
        %1404 = vmatpush1.msra.mxu0 %v1115
        %1405 = vmatprep.subr.mxu0 %v1114
        %1406 = vmatpush1.msra.mxu0 %v1113
        %1407 = vmatprep.subr.mxu0 %v1112
        %1408 = vmatpush1.msra.mxu0 %v1111
        %1409 = vmatprep.subr.mxu0 %v1110
        %1410 = vmatpush1.msra.mxu0 %v1109
        %1411 = vmatprep.subr.mxu0 %v1108
        %1412 = vmatpush1.msra.mxu0 %v1107
        %1413 = vmatprep.subr.mxu0 %v1106
        %1414 = vmatpush1.msra.mxu0 %v1105
        %1415 = vmatprep.subr.mxu0 %v1168
        %1416 = vmatpush2.msra.mxu0 %v1167
        %1417 = vmatprep.subr.mxu0 %v1166
        %1418 = vmatpush2.msra.mxu0 %v1165
        %1419 = vmatprep.subr.mxu0 %v1164
        %1420 = vmatpush2.msra.mxu0 %v1163
        %1421 = vmatprep.subr.mxu0 %v1162
        %1422 = vmatpush2.msra.mxu0 %v1161
        %1423 = vmatprep.subr.mxu0 %v1160
        %1424 = vmatpush2.msra.mxu0 %v1159
        %1425 = vmatprep.subr.mxu0 %v1158
        %1426 = vmatpush2.msra.mxu0 %v1157
        %1427 = vmatprep.subr.mxu0 %v1156
        %1428 = vmatpush2.msra.mxu0 %v1155
        %1429 = vmatprep.subr.mxu0 %v1154
        %1430 = vmatpush2.msra.mxu0 %v1153
        %1431 = vmatprep.subr.mxu0 %v1152
        %1432 = vmatpush2.msra.mxu0 %v1151
        %1433 = vmatprep.subr.mxu0 %v1150
        %1434 = vmatpush2.msra.mxu0 %v1149
        %1435 = vmatprep.subr.mxu0 %v1148
        %1436 = vmatpush2.msra.mxu0 %v1147
        %1437 = vmatprep.subr.mxu0 %v1146
        %1438 = vmatpush2.msra.mxu0 %v1145
        %1439 = vmatprep.subr.mxu0 %v1144
        %1440 = vmatpush2.msra.mxu0 %v1143
        %1441 = vmatprep.subr.mxu0 %v1142
        %1442 = vmatpush2.msra.mxu0 %v1141
        %1443 = vmatprep.subr.mxu0 %v1140
        %1444 = vmatpush2.msra.mxu0 %v1139
        %1445 = vmatprep.subr.mxu0 %v1138
        %1446 = vmatpush2.msra.mxu0 %v1137
        %1447 = vmatprep.mubr.f32.mxu0 %v1074
        %1448 = vmatmul.mubr.f32.gmra.mxu0 %v1073
        %v1449 = vpop.f32.mrf.mxu0
        %v1450 = vadd.f32 %v1289, %v1449
        %v1451 = vpop.f32.mrf.mxu0
        %v1452 = vadd.f32 %v1291, %v1451
        %1453 = vmatprep.mubr.f32.mxu0 %v1076
        %1454 = vmatmul.mubr.f32.gmra.mxu0 %v1075
        %v1455 = vpop.f32.mrf.mxu0
        %v1456 = vadd.f32 %v1295, %v1455
        %v1457 = vpop.f32.mrf.mxu0
        %v1458 = vadd.f32 %v1297, %v1457
        %1459 = vmatprep.mubr.f32.mxu0 %v1078
        %1460 = vmatmul.mubr.f32.gmra.mxu0 %v1077
        %v1461 = vpop.f32.mrf.mxu0
        %v1462 = vadd.f32 %v1301, %v1461
        %v1463 = vpop.f32.mrf.mxu0
        %v1464 = vadd.f32 %v1303, %v1463
        %1465 = vmatprep.mubr.f32.mxu0 %v1080
        %1466 = vmatmul.mubr.f32.gmra.mxu0 %v1079
        %v1467 = vpop.f32.mrf.mxu0
        %v1468 = vadd.f32 %v1307, %v1467
        %v1469 = vpop.f32.mrf.mxu0
        %v1470 = vadd.f32 %v1309, %v1469
        %1471 = vmatprep.mubr.f32.mxu0 %v1082
        %1472 = vmatmul.mubr.f32.gmra.mxu0 %v1081
        %v1473 = vpop.f32.mrf.mxu0
        %v1474 = vadd.f32 %v1313, %v1473
        %v1475 = vpop.f32.mrf.mxu0
        %v1476 = vadd.f32 %v1315, %v1475
        %1477 = vmatprep.mubr.f32.mxu0 %v1084
        %1478 = vmatmul.mubr.f32.gmra.mxu0 %v1083
        %v1479 = vpop.f32.mrf.mxu0
        %v1480 = vadd.f32 %v1319, %v1479
        %v1481 = vpop.f32.mrf.mxu0
        %v1482 = vadd.f32 %v1321, %v1481
        %1483 = vmatprep.mubr.f32.mxu0 %v1086
        %1484 = vmatmul.mubr.f32.gmra.mxu0 %v1085
        %v1485 = vpop.f32.mrf.mxu0
        %v1486 = vadd.f32 %v1325, %v1485
        %v1487 = vpop.f32.mrf.mxu0
        %v1488 = vadd.f32 %v1327, %v1487
        %1489 = vmatprep.mubr.f32.mxu0 %v1088
        %1490 = vmatmul.mubr.f32.gmra.mxu0 %v1087
        %v1491 = vpop.f32.mrf.mxu0
        %v1492 = vadd.f32 %v1331, %v1491
        %v1493 = vpop.f32.mrf.mxu0
        %v1494 = vadd.f32 %v1333, %v1493
        %1495 = vmatprep.mubr.f32.mxu0 %v1090
        %1496 = vmatmul.mubr.f32.gmra.mxu0 %v1089
        %v1497 = vpop.f32.mrf.mxu0
        %v1498 = vadd.f32 %v1337, %v1497
        %v1499 = vpop.f32.mrf.mxu0
        %v1500 = vadd.f32 %v1339, %v1499
        %1501 = vmatprep.mubr.f32.mxu0 %v1092
        %1502 = vmatmul.mubr.f32.gmra.mxu0 %v1091
        %v1503 = vpop.f32.mrf.mxu0
        %v1504 = vadd.f32 %v1343, %v1503
        %v1505 = vpop.f32.mrf.mxu0
        %v1506 = vadd.f32 %v1345, %v1505
        %1507 = vmatprep.mubr.f32.mxu0 %v1094
        %1508 = vmatmul.mubr.f32.gmra.mxu0 %v1093
        %v1509 = vpop.f32.mrf.mxu0
        %v1510 = vadd.f32 %v1349, %v1509
        %v1511 = vpop.f32.mrf.mxu0
        %v1512 = vadd.f32 %v1351, %v1511
        %1513 = vmatprep.mubr.f32.mxu0 %v1096
        %1514 = vmatmul.mubr.f32.gmra.mxu0 %v1095
        %v1515 = vpop.f32.mrf.mxu0
        %v1516 = vadd.f32 %v1355, %v1515
        %v1517 = vpop.f32.mrf.mxu0
        %v1518 = vadd.f32 %v1357, %v1517
        %1519 = vmatprep.mubr.f32.mxu0 %v1098
        %1520 = vmatmul.mubr.f32.gmra.mxu0 %v1097
        %v1521 = vpop.f32.mrf.mxu0
        %v1522 = vadd.f32 %v1361, %v1521
        %v1523 = vpop.f32.mrf.mxu0
        %v1524 = vadd.f32 %v1363, %v1523
        %1525 = vmatprep.mubr.f32.mxu0 %v1100
        %1526 = vmatmul.mubr.f32.gmra.mxu0 %v1099
        %v1527 = vpop.f32.mrf.mxu0
        %v1528 = vadd.f32 %v1367, %v1527
        %v1529 = vpop.f32.mrf.mxu0
        %v1530 = vadd.f32 %v1369, %v1529
        %1531 = vmatprep.mubr.f32.mxu0 %v1102
        %1532 = vmatmul.mubr.f32.gmra.mxu0 %v1101
        %v1533 = vpop.f32.mrf.mxu0
        %v1534 = vadd.f32 %v1373, %v1533
        %v1535 = vpop.f32.mrf.mxu0
        %v1536 = vadd.f32 %v1375, %v1535
        %1537 = vmatprep.mubr.f32.mxu0 %v1104
        %1538 = vmatmul.mubr.f32.gmra.mxu0 %v1103
        %v1539 = vpop.f32.mrf.mxu0
        %v1540 = vadd.f32 %v1379, %v1539
        %v1541 = vpop.f32.mrf.mxu0
        %v1542 = vadd.f32 %v1381, %v1541
        %1543 = vdwg.mxu0
        %v1544 = vld [vmem:[%s4] sm:$0x3]
        %v1546 = vlaneseq
        %v1547 = vshrl.u32 %v1546, 7
        %v1548 = vsub.s32 0, %v1547
        %v1549 = vrot.slane %v1544, %v1548
        %v1550 = vlaneseq
        %v1551 = vshrl.u32 %v1550, 7
        %v1552 = vsub.s32 1, %v1551
        %v1553 = vrot.slane %v1544, %v1552
        %v1556 = vadd.f32 %v1450, %v1549
        %v1557 = vadd.f32 %v1452, %v1553
        %v1558 = vadd.f32 %v1456, %v1549
        %v1559 = vadd.f32 %v1458, %v1553
        %v1560 = vadd.f32 %v1462, %v1549
        %v1561 = vadd.f32 %v1464, %v1553
        %v1562 = vadd.f32 %v1468, %v1549
        %v1563 = vadd.f32 %v1470, %v1553
        %v1564 = vadd.f32 %v1474, %v1549
        %v1565 = vadd.f32 %v1476, %v1553
        %v1566 = vadd.f32 %v1480, %v1549
        %v1567 = vadd.f32 %v1482, %v1553
        %v1568 = vadd.f32 %v1486, %v1549
        %v1569 = vadd.f32 %v1488, %v1553
        %v1570 = vadd.f32 %v1492, %v1549
        %v1571 = vadd.f32 %v1494, %v1553
        %v1572 = vadd.f32 %v1498, %v1549
        %v1573 = vadd.f32 %v1500, %v1553
        %v1574 = vadd.f32 %v1504, %v1549
        %v1575 = vadd.f32 %v1506, %v1553
        %v1576 = vadd.f32 %v1510, %v1549
        %v1577 = vadd.f32 %v1512, %v1553
        %v1578 = vadd.f32 %v1516, %v1549
        %v1579 = vadd.f32 %v1518, %v1553
        %v1580 = vadd.f32 %v1522, %v1549
        %v1581 = vadd.f32 %v1524, %v1553
        %v1582 = vadd.f32 %v1528, %v1549
        %v1583 = vadd.f32 %v1530, %v1553
        %v1584 = vadd.f32 %v1534, %v1549
        %v1585 = vadd.f32 %v1536, %v1553
        %v1586 = vadd.f32 %v1540, %v1549
        %v1587 = vadd.f32 %v1542, %v1553
        %v1588 = vmax.f32 %v1556, 0.0
        %v1589 = vmax.f32 %v1557, 0.0
        %v1590 = vmax.f32 %v1558, 0.0
        %v1591 = vmax.f32 %v1559, 0.0
        %v1592 = vmax.f32 %v1560, 0.0
        %v1593 = vmax.f32 %v1561, 0.0
        %v1594 = vmax.f32 %v1562, 0.0
        %v1595 = vmax.f32 %v1563, 0.0
        %v1596 = vmax.f32 %v1564, 0.0
        %v1597 = vmax.f32 %v1565, 0.0
        %v1598 = vmax.f32 %v1566, 0.0
        %v1599 = vmax.f32 %v1567, 0.0
        %v1600 = vmax.f32 %v1568, 0.0
        %v1601 = vmax.f32 %v1569, 0.0
        %v1602 = vmax.f32 %v1570, 0.0
        %v1603 = vmax.f32 %v1571, 0.0
        %v1604 = vmax.f32 %v1572, 0.0
        %v1605 = vmax.f32 %v1573, 0.0
        %v1606 = vmax.f32 %v1574, 0.0
        %v1607 = vmax.f32 %v1575, 0.0
        %v1608 = vmax.f32 %v1576, 0.0
        %v1609 = vmax.f32 %v1577, 0.0
        %v1610 = vmax.f32 %v1578, 0.0
        %v1611 = vmax.f32 %v1579, 0.0
        %v1612 = vmax.f32 %v1580, 0.0
        %v1613 = vmax.f32 %v1581, 0.0
        %v1614 = vmax.f32 %v1582, 0.0
        %v1615 = vmax.f32 %v1583, 0.0
        %v1616 = vmax.f32 %v1584, 0.0
        %v1617 = vmax.f32 %v1585, 0.0
        %v1618 = vmax.f32 %v1586, 0.0
        %v1619 = vmax.f32 %v1587, 0.0
        %v1620 = vld [vmem:[#allocation3] sm:$0xff]
        %v1621 = vld [vmem:[#allocation3 + $0x8] sm:$0xff]
        %v1622 = vld [vmem:[#allocation3 + $0x10] sm:$0xff]
        %v1623 = vld [vmem:[#allocation3 + $0x18] sm:$0xff]
        %v1624 = vld [vmem:[#allocation3 + $0x20] sm:$0xff]
        %v1625 = vld [vmem:[#allocation3 + $0x28] sm:$0xff]
        %v1626 = vld [vmem:[#allocation3 + $0x30] sm:$0xff]
        %v1627 = vld [vmem:[#allocation3 + $0x38] sm:$0xff]
        %v1628 = vld [vmem:[#allocation3 + $0x40] sm:$0xff]
        %v1629 = vld [vmem:[#allocation3 + $0x48] sm:$0xff]
        %v1630 = vld [vmem:[#allocation3 + $0x50] sm:$0xff]
        %v1631 = vld [vmem:[#allocation3 + $0x58] sm:$0xff]
        %v1632 = vld [vmem:[#allocation3 + $0x60] sm:$0xff]
        %v1633 = vld [vmem:[#allocation3 + $0x68] sm:$0xff]
        %v1634 = vld [vmem:[#allocation3 + $0x70] sm:$0xff]
        %v1635 = vld [vmem:[#allocation3 + $0x78] sm:$0xff]
        %v1636 = vld [vmem:[#allocation3 + $0x80] sm:$0xff]
        %v1637 = vld [vmem:[#allocation3 + $0x88] sm:$0xff]
        %v1638 = vld [vmem:[#allocation3 + $0x90] sm:$0xff]
        %v1639 = vld [vmem:[#allocation3 + $0x98] sm:$0xff]
        %v1640 = vld [vmem:[#allocation3 + $0xa0] sm:$0xff]
        %v1641 = vld [vmem:[#allocation3 + $0xa8] sm:$0xff]
        %v1642 = vld [vmem:[#allocation3 + $0xb0] sm:$0xff]
        %v1643 = vld [vmem:[#allocation3 + $0xb8] sm:$0xff]
        %v1644 = vld [vmem:[#allocation3 + $0xc0] sm:$0xff]
        %v1645 = vld [vmem:[#allocation3 + $0xc8] sm:$0xff]
        %v1646 = vld [vmem:[#allocation3 + $0xd0] sm:$0xff]
        %v1647 = vld [vmem:[#allocation3 + $0xd8] sm:$0xff]
        %v1648 = vld [vmem:[#allocation3 + $0xe0] sm:$0xff]
        %v1649 = vld [vmem:[#allocation3 + $0xe8] sm:$0xff]
        %v1650 = vld [vmem:[#allocation3 + $0xf0] sm:$0xff]
        %v1651 = vld [vmem:[#allocation3 + $0xf8] sm:$0xff]
        %v1652 = vld [vmem:[%s6] sm:$0x1]
        %v1654 = vlaneseq
        %v1655 = vshrl.u32 %v1654, 7
        %v1656 = vsub.s32 0, %v1655
        %v1657 = vrot.slane %v1652, %v1656
        %1659 = vmatprep.subr.mxu0 0.0
        %1660 = vmatpush1.msra.mxu0 %v1635
        %1661 = vmatprep.subr.mxu0 0.0
        %1662 = vmatpush1.msra.mxu0 %v1634
        %1663 = vmatprep.subr.mxu0 0.0
        %1664 = vmatpush1.msra.mxu0 %v1633
        %1665 = vmatprep.subr.mxu0 0.0
        %1666 = vmatpush1.msra.mxu0 %v1632
        %1667 = vmatprep.subr.mxu0 0.0
        %1668 = vmatpush1.msra.mxu0 %v1631
        %1669 = vmatprep.subr.mxu0 0.0
        %1670 = vmatpush1.msra.mxu0 %v1630
        %1671 = vmatprep.subr.mxu0 0.0
        %1672 = vmatpush1.msra.mxu0 %v1629
        %1673 = vmatprep.subr.mxu0 0.0
        %1674 = vmatpush1.msra.mxu0 %v1628
        %1675 = vmatprep.subr.mxu0 0.0
        %1676 = vmatpush1.msra.mxu0 %v1627
        %1677 = vmatprep.subr.mxu0 0.0
        %1678 = vmatpush1.msra.mxu0 %v1626
        %1679 = vmatprep.subr.mxu0 0.0
        %1680 = vmatpush1.msra.mxu0 %v1625
        %1681 = vmatprep.subr.mxu0 0.0
        %1682 = vmatpush1.msra.mxu0 %v1624
        %1683 = vmatprep.subr.mxu0 0.0
        %1684 = vmatpush1.msra.mxu0 %v1623
        %1685 = vmatprep.subr.mxu0 0.0
        %1686 = vmatpush1.msra.mxu0 %v1622
        %1687 = vmatprep.subr.mxu0 0.0
        %1688 = vmatpush1.msra.mxu0 %v1621
        %1689 = vmatprep.subr.mxu0 0.0
        %1690 = vmatpush1.msra.mxu0 %v1620
        %1691 = vmatprep.subr.mxu0 0.0
        %1692 = vmatpush2.msra.mxu0 %v1651
        %1693 = vmatprep.subr.mxu0 0.0
        %1694 = vmatpush2.msra.mxu0 %v1650
        %1695 = vmatprep.subr.mxu0 0.0
        %1696 = vmatpush2.msra.mxu0 %v1649
        %1697 = vmatprep.subr.mxu0 0.0
        %1698 = vmatpush2.msra.mxu0 %v1648
        %1699 = vmatprep.subr.mxu0 0.0
        %1700 = vmatpush2.msra.mxu0 %v1647
        %1701 = vmatprep.subr.mxu0 0.0
        %1702 = vmatpush2.msra.mxu0 %v1646
        %1703 = vmatprep.subr.mxu0 0.0
        %1704 = vmatpush2.msra.mxu0 %v1645
        %1705 = vmatprep.subr.mxu0 0.0
        %1706 = vmatpush2.msra.mxu0 %v1644
        %1707 = vmatprep.subr.mxu0 0.0
        %1708 = vmatpush2.msra.mxu0 %v1643
        %1709 = vmatprep.subr.mxu0 0.0
        %1710 = vmatpush2.msra.mxu0 %v1642
        %1711 = vmatprep.subr.mxu0 0.0
        %1712 = vmatpush2.msra.mxu0 %v1641
        %1713 = vmatprep.subr.mxu0 0.0
        %1714 = vmatpush2.msra.mxu0 %v1640
        %1715 = vmatprep.subr.mxu0 0.0
        %1716 = vmatpush2.msra.mxu0 %v1639
        %1717 = vmatprep.subr.mxu0 0.0
        %1718 = vmatpush2.msra.mxu0 %v1638
        %1719 = vmatprep.subr.mxu0 0.0
        %1720 = vmatpush2.msra.mxu0 %v1637
        %1721 = vmatprep.subr.mxu0 0.0
        %1722 = vmatpush2.msra.mxu0 %v1636
        %1723 = vmatprep.mubr.f32.mxu0 %v1589
        %1724 = vmatmul.mubr.f32.gmra.mxu0 %v1588
        %v1725 = vpop.f32.mrf.mxu0
        %v1726 = vadd.f32 %v1657, %v1725
        %v1727 = vpop.f32.mrf.mxu0
        %1728 = vmatprep.mubr.f32.mxu0 %v1591
        %1729 = vmatmul.mubr.f32.gmra.mxu0 %v1590
        %v1730 = vpop.f32.mrf.mxu0
        %v1731 = vadd.f32 %v1657, %v1730
        %v1732 = vpop.f32.mrf.mxu0
        %1733 = vmatprep.mubr.f32.mxu0 %v1593
        %1734 = vmatmul.mubr.f32.gmra.mxu0 %v1592
        %v1735 = vpop.f32.mrf.mxu0
        %v1736 = vadd.f32 %v1657, %v1735
        %v1737 = vpop.f32.mrf.mxu0
        %1738 = vmatprep.mubr.f32.mxu0 %v1595
        %1739 = vmatmul.mubr.f32.gmra.mxu0 %v1594
        %v1740 = vpop.f32.mrf.mxu0
        %v1741 = vadd.f32 %v1657, %v1740
        %v1742 = vpop.f32.mrf.mxu0
        %1743 = vmatprep.mubr.f32.mxu0 %v1597
        %1744 = vmatmul.mubr.f32.gmra.mxu0 %v1596
        %v1745 = vpop.f32.mrf.mxu0
        %v1746 = vadd.f32 %v1657, %v1745
        %v1747 = vpop.f32.mrf.mxu0
        %1748 = vmatprep.mubr.f32.mxu0 %v1599
        %1749 = vmatmul.mubr.f32.gmra.mxu0 %v1598
        %v1750 = vpop.f32.mrf.mxu0
        %v1751 = vadd.f32 %v1657, %v1750
        %v1752 = vpop.f32.mrf.mxu0
        %1753 = vmatprep.mubr.f32.mxu0 %v1601
        %1754 = vmatmul.mubr.f32.gmra.mxu0 %v1600
        %v1755 = vpop.f32.mrf.mxu0
        %v1756 = vadd.f32 %v1657, %v1755
        %v1757 = vpop.f32.mrf.mxu0
        %1758 = vmatprep.mubr.f32.mxu0 %v1603
        %1759 = vmatmul.mubr.f32.gmra.mxu0 %v1602
        %v1760 = vpop.f32.mrf.mxu0
        %v1761 = vadd.f32 %v1657, %v1760
        %v1762 = vpop.f32.mrf.mxu0
        %1763 = vmatprep.mubr.f32.mxu0 %v1605
        %1764 = vmatmul.mubr.f32.gmra.mxu0 %v1604
        %v1765 = vpop.f32.mrf.mxu0
        %v1766 = vadd.f32 %v1657, %v1765
        %v1767 = vpop.f32.mrf.mxu0
        %1768 = vmatprep.mubr.f32.mxu0 %v1607
        %1769 = vmatmul.mubr.f32.gmra.mxu0 %v1606
        %v1770 = vpop.f32.mrf.mxu0
        %v1771 = vadd.f32 %v1657, %v1770
        %v1772 = vpop.f32.mrf.mxu0
        %1773 = vmatprep.mubr.f32.mxu0 %v1609
        %1774 = vmatmul.mubr.f32.gmra.mxu0 %v1608
        %v1775 = vpop.f32.mrf.mxu0
        %v1776 = vadd.f32 %v1657, %v1775
        %v1777 = vpop.f32.mrf.mxu0
        %1778 = vmatprep.mubr.f32.mxu0 %v1611
        %1779 = vmatmul.mubr.f32.gmra.mxu0 %v1610
        %v1780 = vpop.f32.mrf.mxu0
        %v1781 = vadd.f32 %v1657, %v1780
        %v1782 = vpop.f32.mrf.mxu0
        %1783 = vmatprep.mubr.f32.mxu0 %v1613
        %1784 = vmatmul.mubr.f32.gmra.mxu0 %v1612
        %v1785 = vpop.f32.mrf.mxu0
        %v1786 = vadd.f32 %v1657, %v1785
        %v1787 = vpop.f32.mrf.mxu0
        %1788 = vmatprep.mubr.f32.mxu0 %v1615
        %1789 = vmatmul.mubr.f32.gmra.mxu0 %v1614
        %v1790 = vpop.f32.mrf.mxu0
        %v1791 = vadd.f32 %v1657, %v1790
        %v1792 = vpop.f32.mrf.mxu0
        %1793 = vmatprep.mubr.f32.mxu0 %v1617
        %1794 = vmatmul.mubr.f32.gmra.mxu0 %v1616
        %v1795 = vpop.f32.mrf.mxu0
        %v1796 = vadd.f32 %v1657, %v1795
        %v1797 = vpop.f32.mrf.mxu0
        %1798 = vmatprep.mubr.f32.mxu0 %v1619
        %1799 = vmatmul.mubr.f32.gmra.mxu0 %v1618
        %v1800 = vpop.f32.mrf.mxu0
        %v1801 = vadd.f32 %v1657, %v1800
        %v1802 = vpop.f32.mrf.mxu0
        %1803 = vdwg.mxu0
        %v1804 = vmax.f32 %v1726, 0.0
        %v1805 = vmax.f32 %v1731, 0.0
        %v1806 = vmax.f32 %v1736, 0.0
        %v1807 = vmax.f32 %v1741, 0.0
        %v1808 = vmax.f32 %v1746, 0.0
        %v1809 = vmax.f32 %v1751, 0.0
        %v1810 = vmax.f32 %v1756, 0.0
        %v1811 = vmax.f32 %v1761, 0.0
        %v1812 = vmax.f32 %v1766, 0.0
        %v1813 = vmax.f32 %v1771, 0.0
        %v1814 = vmax.f32 %v1776, 0.0
        %v1815 = vmax.f32 %v1781, 0.0
        %v1816 = vmax.f32 %v1786, 0.0
        %v1817 = vmax.f32 %v1791, 0.0
        %v1818 = vmax.f32 %v1796, 0.0
        %v1819 = vmax.f32 %v1801, 0.0
        %v1820 = vld [vmem:[%s7] sm:$0x1]
        %v1821 = vld [vmem:[%s8] sm:$0x1]
        %v1823 = vsel %vm1173, %v1821, 0
        %1825 = vmatprep.subr.mxu0 0.0
        %1826 = vmatpush1.xpose.msra.mxu0 %v1220
        %1827 = vmatprep.subr.mxu0 0.0
        %1828 = vmatpush1.xpose.msra.mxu0 %v1217
        %1829 = vmatprep.subr.mxu0 0.0
        %1830 = vmatpush1.xpose.msra.mxu0 %v1214
        %1831 = vmatprep.subr.mxu0 0.0
        %1832 = vmatpush1.xpose.msra.mxu0 %v1211
        %1833 = vmatprep.subr.mxu0 0.0
        %1834 = vmatpush1.xpose.msra.mxu0 %v1208
        %1835 = vmatprep.subr.mxu0 0.0
        %1836 = vmatpush1.xpose.msra.mxu0 %v1205
        %1837 = vmatprep.subr.mxu0 0.0
        %1838 = vmatpush1.xpose.msra.mxu0 %v1202
        %1839 = vmatprep.subr.mxu0 0.0
        %1840 = vmatpush1.xpose.msra.mxu0 %v1199
        %1841 = vmatprep.subr.mxu0 0.0
        %1842 = vmatpush1.xpose.msra.mxu0 %v1196
        %1843 = vmatprep.subr.mxu0 0.0
        %1844 = vmatpush1.xpose.msra.mxu0 %v1193
        %1845 = vmatprep.subr.mxu0 0.0
        %1846 = vmatpush1.xpose.msra.mxu0 %v1190
        %1847 = vmatprep.subr.mxu0 0.0
        %1848 = vmatpush1.xpose.msra.mxu0 %v1187
        %1849 = vmatprep.subr.mxu0 0.0
        %1850 = vmatpush1.xpose.msra.mxu0 %v1184
        %1851 = vmatprep.subr.mxu0 0.0
        %1852 = vmatpush1.xpose.msra.mxu0 %v1181
        %1853 = vmatprep.subr.mxu0 0.0
        %1854 = vmatpush1.xpose.msra.mxu0 %v1178
        %1855 = vmatprep.subr.mxu0 0.0
        %1856 = vmatpush1.xpose.msra.mxu0 %v1175
        %1857 = vmatprep.subr.mxu0 0.0
        %1858 = vmatpush2.xpose.msra.mxu0 0.0
        %1859 = vmatprep.subr.mxu0 0.0
        %1860 = vmatpush2.xpose.msra.mxu0 0.0
        %1861 = vmatprep.subr.mxu0 0.0
        %1862 = vmatpush2.xpose.msra.mxu0 0.0
        %1863 = vmatprep.subr.mxu0 0.0
        %1864 = vmatpush2.xpose.msra.mxu0 0.0
        %1865 = vmatprep.subr.mxu0 0.0
        %1866 = vmatpush2.xpose.msra.mxu0 0.0
        %1867 = vmatprep.subr.mxu0 0.0
        %1868 = vmatpush2.xpose.msra.mxu0 0.0
        %1869 = vmatprep.subr.mxu0 0.0
        %1870 = vmatpush2.xpose.msra.mxu0 0.0
        %1871 = vmatprep.subr.mxu0 0.0
        %1872 = vmatpush2.xpose.msra.mxu0 0.0
        %1873 = vmatprep.subr.mxu0 0.0
        %1874 = vmatpush2.xpose.msra.mxu0 0.0
        %1875 = vmatprep.subr.mxu0 0.0
        %1876 = vmatpush2.xpose.msra.mxu0 0.0
        %1877 = vmatprep.subr.mxu0 0.0
        %1878 = vmatpush2.xpose.msra.mxu0 0.0
        %1879 = vmatprep.subr.mxu0 0.0
        %1880 = vmatpush2.xpose.msra.mxu0 0.0
        %1881 = vmatprep.subr.mxu0 0.0
        %1882 = vmatpush2.xpose.msra.mxu0 0.0
        %1883 = vmatprep.subr.mxu0 0.0
        %1884 = vmatpush2.xpose.msra.mxu0 0.0
        %1885 = vmatprep.subr.mxu0 0.0
        %1886 = vmatpush2.xpose.msra.mxu0 0.0
        %1887 = vmatprep.subr.mxu0 0.0
        %1888 = vmatpush2.xpose.msra.mxu0 0.0
        %1889 = vmatprep.mubr.f32.mxu0 0.0
        %1890 = vmatmul.mubr.f32.gmra.mxu0 %v1823
        %v1891 = vpop.f32.mrf.mxu0
        %v1892 = vadd.f32 0.0, %v1891
        %v1893 = vpop.f32.mrf.mxu0
        %1894 = vdwg.mxu0
        %1895 = vmatprep.subr.mxu0 0.0
        %1896 = vmatpush1.xpose.msra.mxu0 %v1819
        %1897 = vmatprep.subr.mxu0 0.0
        %1898 = vmatpush1.xpose.msra.mxu0 %v1818
        %1899 = vmatprep.subr.mxu0 0.0
        %1900 = vmatpush1.xpose.msra.mxu0 %v1817
        %1901 = vmatprep.subr.mxu0 0.0
        %1902 = vmatpush1.xpose.msra.mxu0 %v1816
        %1903 = vmatprep.subr.mxu0 0.0
        %1904 = vmatpush1.xpose.msra.mxu0 %v1815
        %1905 = vmatprep.subr.mxu0 0.0
        %1906 = vmatpush1.xpose.msra.mxu0 %v1814
        %1907 = vmatprep.subr.mxu0 0.0
        %1908 = vmatpush1.xpose.msra.mxu0 %v1813
        %1909 = vmatprep.subr.mxu0 0.0
        %1910 = vmatpush1.xpose.msra.mxu0 %v1812
        %1911 = vmatprep.subr.mxu0 0.0
        %1912 = vmatpush1.xpose.msra.mxu0 %v1811
        %1913 = vmatprep.subr.mxu0 0.0
        %1914 = vmatpush1.xpose.msra.mxu0 %v1810
        %1915 = vmatprep.subr.mxu0 0.0
        %1916 = vmatpush1.xpose.msra.mxu0 %v1809
        %1917 = vmatprep.subr.mxu0 0.0
        %1918 = vmatpush1.xpose.msra.mxu0 %v1808
        %1919 = vmatprep.subr.mxu0 0.0
        %1920 = vmatpush1.xpose.msra.mxu0 %v1807
        %1921 = vmatprep.subr.mxu0 0.0
        %1922 = vmatpush1.xpose.msra.mxu0 %v1806
        %1923 = vmatprep.subr.mxu0 0.0
        %1924 = vmatpush1.xpose.msra.mxu0 %v1805
        %1925 = vmatprep.subr.mxu0 0.0
        %1926 = vmatpush1.xpose.msra.mxu0 %v1804
        %1927 = vmatprep.subr.mxu0 0.0
        %1928 = vmatpush2.xpose.msra.mxu0 0.0
        %1929 = vmatprep.subr.mxu0 0.0
        %1930 = vmatpush2.xpose.msra.mxu0 0.0
        %1931 = vmatprep.subr.mxu0 0.0
        %1932 = vmatpush2.xpose.msra.mxu0 0.0
        %1933 = vmatprep.subr.mxu0 0.0
        %1934 = vmatpush2.xpose.msra.mxu0 0.0
        %1935 = vmatprep.subr.mxu0 0.0
        %1936 = vmatpush2.xpose.msra.mxu0 0.0
        %1937 = vmatprep.subr.mxu0 0.0
        %1938 = vmatpush2.xpose.msra.mxu0 0.0
        %1939 = vmatprep.subr.mxu0 0.0
        %1940 = vmatpush2.xpose.msra.mxu0 0.0
        %1941 = vmatprep.subr.mxu0 0.0
        %1942 = vmatpush2.xpose.msra.mxu0 0.0
        %1943 = vmatprep.subr.mxu0 0.0
        %1944 = vmatpush2.xpose.msra.mxu0 0.0
        %1945 = vmatprep.subr.mxu0 0.0
        %1946 = vmatpush2.xpose.msra.mxu0 0.0
        %1947 = vmatprep.subr.mxu0 0.0
        %1948 = vmatpush2.xpose.msra.mxu0 0.0
        %1949 = vmatprep.subr.mxu0 0.0
        %1950 = vmatpush2.xpose.msra.mxu0 0.0
        %1951 = vmatprep.subr.mxu0 0.0
        %1952 = vmatpush2.xpose.msra.mxu0 0.0
        %1953 = vmatprep.subr.mxu0 0.0
        %1954 = vmatpush2.xpose.msra.mxu0 0.0
        %1955 = vmatprep.subr.mxu0 0.0
        %1956 = vmatpush2.xpose.msra.mxu0 0.0
        %1957 = vmatprep.subr.mxu0 0.0
        %1958 = vmatpush2.xpose.msra.mxu0 0.0
        %1959 = vmatprep.mubr.f32.mxu0 0.0
        %1960 = vmatmul.mubr.f32.gmra.mxu0 %v1820
        %v1961 = vpop.f32.mrf.mxu0
        %v1962 = vadd.f32 %v1892, %v1961
        %v1963 = vpop.f32.mrf.mxu0
        %1964 = vdwg.mxu0
        %v1965 = vld [vmem:[#allocation2] sm:$0x1]
        %1967 = vset.pattern.permute.xlu0 0
        %1968 = vperm.xlu0 %1967, %v1965
        %v1969 = vpop.permute.xlu0 %1968
        %v1971 = vlaneseq
        %v1972 = vshrl.u32 %v1971, 7
        %v1973 = vsub.s32 0, %v1972
        %v1974 = vrot.slane %v1969, %v1973
        %v1975 = vadd.f32 %v1962, %v1974
        %v1976 = vxor.u32 %v1975, 2147483648
        %v1977 = vmul.f32 %v1976, 1.442695
        %v1978 = vpow.pop %v1977
        %v1979 = vadd.f32 %v1978, 1.0
        %v1980 = vrcp.pop %v1979
        %v1981 = vmul.f32 1.0, %v1980
        %1982 = vst [vmem:[%s385] sm:$0x1] %v1981
        %s1983 = sand.u32 %s255, 1
        %s1984 = scalar_lea.sflag [#allocation5], %s1983
        %s1985 = sand.u32 %s255, 1
        %s1986 = scalar_lea.vmem [#allocation6], %s1985
        // Predicated region
        $region65: #{tpu_custom_call.1} parent=59 // pred_check
          %p1987 = pneg %p265
        $region66: #{tpu_custom_call.1} parent=59 // pred_check_branch
          %1989 = sbr.rel (%p1987) target = $region68
        $region67: #{tpu_custom_call.1} parent=59 // pred_region
          %s1991 = ssub.s32 16, 16
          %1992 = vsyncadd %s1984, %s1991
          %s1993 = smul.addr %s27, 16
          %s1994 = scalar_lea.hbm %s10, %s1993
          %s1996 = sshll.u32 %s1986, 4
          %s1997 = int_to_ptr.vmem [resolvable:$true] %s1996
          %1999 = dma.vmem_to_hbm [thread:$0]  %s1997, 16, %s1994, %s1984
        $region68: #{tpu_custom_call.1} parent=59 // pred_fallthru
          _
      $region60: #{tpu_custom_call.1} parent=5 // pred_fallthru
        _
      %p2000 = scmp.le.s32.totalorder 2, %s22
      // Predicated region
      $region69: #{tpu_custom_call.1} parent=5 // pred_check
        %p2001 = pneg %p2000
      $region70: #{tpu_custom_call.1} parent=5 // pred_check_branch
        %2003 = sbr.rel (%p2001) target = $region72
      $region71: #{tpu_custom_call.1} parent=5 // pred_region
        %s2004 = ssub.s32 %s22, 2
        // Predicated region
        $region73: #{tpu_custom_call.1} parent=71 // pred_check
          %p2005 = pneg %p271
        $region74: #{tpu_custom_call.1} parent=71 // pred_check_branch
          %2007 = sbr.rel (%p2005) target = $region76
        $region75: #{tpu_custom_call.1} parent=71 // pred_region
          %s2008 = sand.u32 %s256, 1
          %s2009 = scalar_lea.sflag [#allocation5], %s2008
          %s2010 = sand.u32 %s256, 1
          %s2011 = scalar_lea.vmem [#allocation6], %s2010
          %2012 = dma.done %s2009, 16
        $region76: #{tpu_custom_call.1} parent=71 // pred_fallthru
          _
      $region72: #{tpu_custom_call.1} parent=5 // pred_fallthru
        _
    $region6: #{tpu_custom_call.1} parent=1 // loop_footer
      %s26 = sadd.s32 1, %s22
    $region7: #{tpu_custom_call.1} parent=1 // loop_footer_branch
      %21 = sbr.rel target = $region3
    $region8: #{tpu_custom_call.1} parent=1 // loop_exit
      _
    %2013 = vsyncpa [#allocation4], 1
    %s2014 = scalar_lea.sflag [#allocation4], 1
    %2015 = vsyncpa %s2014, 1
    %2016 = vsyncpa [#allocation5], 1
    %s2017 = scalar_lea.sflag [#allocation5], 1
    %2018 = vsyncpa %s2017, 1

</llo_original>
